<compile_context>
chip_gen: v7x
topology: tpu7x:2x2x1
jax: 0.10.0
libtpu: 0.0.40
codegen_flags: <defaults>
</compile_context>

<pallas_src>
import math
import functools

import jax
import jax.numpy as jnp
from jax import lax
from jax.experimental import pallas as pl
from jax.experimental.pallas import tpu as pltpu


def _round_up(v, m):
    return (v + m - 1) // m * m


def _vmem_capacity_bytes():
    """Device VMEM capacity; conservative (v7x, 64 MiB) if unqueryable."""
    try:
        return int(pltpu.get_tpu_info().vmem_capacity_bytes)
    except Exception:
        return 64 << 20


def gf_db_kernel(x_ref, s_ref, h_ref, y_ref, z_ref, *,
                 E, K, g_pad, stride_e, bias_row, n_sub, t_blk, s_dtype):
    """One (batch, time-block) grid step.

    x_ref: (T_BLK, G_pad, N_pad)        input signal x(t) (b, tb dims squeezed)
    s_ref: (T_BLK, E, n_sub, N_pad)     GSO S(t): contraction dim padded to 8,
                                        lane dim padded to 128, cast to s_dtype
    h_ref: (F_pad, Z_ROWS)              flattened taps; column bias_row = bias
    y_ref: (T_BLK, F_pad, N_pad)        output y(t)
    z_ref: (Z_ROWS, N_pad) f32 scratch  carried taps; row e*stride_e + k*g_pad
                                        + g holds z_k(t, e)[g]; row bias_row is
                                        all-ones (bias trick); rest stays zero.
    """
    tb = pl.program_id(1)

    @pl.when(tb == 0)
    def _():
        # New batch element: reset carried state (zeros + the ones/bias row).
        row = lax.broadcasted_iota(jnp.int32, z_ref.shape, 0)
        z_ref[...] = jnp.where(row == bias_row, 1.0, 0.0).astype(z_ref.dtype)

    h = h_ref[...]  # hoisted out of the time loop

    def step(lt, carry):
        x_t = x_ref[lt].astype(jnp.float32)            # (G_pad, N_pad)
        s_t = s_ref[lt]                                # (E, n_sub, N_pad)
        for e in range(E):                             # E is small; static unroll
            base = e * stride_e
            if K > 1:
                # Old taps 0..K-2 (explicit load BEFORE the store below, so the
                # in-place shift is free of read-after-write aliasing).
                z_prev = z_ref[pl.ds(base, (K - 1) * g_pad), :]
                if n_sub != z_ref.shape[1]:
                    z_prev = z_prev[:, :n_sub]         # drop zero lanes >= n_sub
                prop = jnp.dot(z_prev.astype(s_dtype), s_t[e],
                               preferred_element_type=jnp.float32)
                # Fused, 8-row-aligned store: [new tap 0 ; new taps 1..K-1].
                new_blk = jnp.concatenate([x_t, prop], axis=0)
            else:
                new_blk = x_t
            z_ref[pl.ds(base, K * g_pad), :] = new_blk
        # Single fused MXU pass over all (e, k, g) taps; bias rides along as
        # h[:, bias_row] * ones-row.
        y = jnp.dot(h, z_ref[...], preferred_element_type=jnp.float32)
        y_ref[lt] = y.astype(y_ref.dtype)
        return carry

    lax.fori_loop(0, t_blk, step, 0, unroll=bool(t_blk <= 8))


def graph_filter_db(x, S, weight, bias=None, *, s_dtype=jnp.bfloat16,
                    t_blk=None):
    """Pallas implementation of GraphFilter_DB.forward (LSIGF_DB).

    s_dtype: dtype for the streamed GSO (bfloat16 by default per the HBM
             roofline; pass jnp.float32 for bit-tight results).
    t_blk:   time-block size; None -> auto-sized from device VMEM capacity.
    """
    B, T, G, N = x.shape
    F, E, K, Gw = weight.shape
    assert Gw == G
    assert S.shape == (B, T, E, N, N)
    if bias is not None:
        assert bias.shape == (F, 1)

    # ---- padded / aligned geometry --------------------------------------
    N_pad = _round_up(N, 128)          # lane (output) dim of S, x, z, y
    n_sub = _round_up(N, 8)            # contraction (sublane) dim of S only
    G_pad = _round_up(G, 8)            # per-tap row stride in z (aligned store)
    F_pad = _round_up(F, 8)
    stride_e = K * G_pad               # per-edge-feature row stride in z
    bias_row = E * stride_e            # ones row pairing with the bias column
    Z_ROWS = _round_up(bias_row + 1, 8)

    # ---- wrapper-side padding / casts -----------------------------------
    # Padded graph nodes carry exact zeros through the recursion (zero
    # rows/cols of S), so results are unchanged.
    x_dtype = x.dtype

    # Pick T_BLK from the VMEM budget, then pad T up to a multiple of it.
    s_bytes = jnp.dtype(s_dtype).itemsize
    per_step = (E * n_sub * N_pad * s_bytes          # S(t)
                + G_pad * N_pad * jnp.dtype(x_dtype).itemsize  # x(t)
                + F_pad * N_pad * jnp.dtype(x_dtype).itemsize)  # y(t)
    fixed = 2 * F_pad * Z_ROWS * 4 + Z_ROWS * N_pad * 4        # h (x2 buf) + z
    cap = _vmem_capacity_bytes()
    budget = cap // 3                                 # double-buffered operands
    if t_blk is None:
        t_blk = int(max(1, min(T, (budget - fixed) // max(1, 2 * per_step))))
    else:
        t_blk = int(max(1, min(int(t_blk), T)))
    T_pad = _round_up(T, t_blk)
    need = 2 * t_blk * per_step + fixed
    vmem_limit = int(max(2 * need, 32 << 20))
    vmem_limit = int(min(vmem_limit, cap - (4 << 20)))
    vmem_limit = int(max(vmem_limit, need + (4 << 20)))

    x_p = jnp.pad(x, ((0, 0), (0, T_pad - T), (0, G_pad - G), (0, N_pad - N)))
    S_p = jnp.pad(S, ((0, 0), (0, T_pad - T), (0, 0),
                      (0, n_sub - N), (0, N_pad - N))).astype(s_dtype)

    # Flatten the taps so one (F_pad, Z_ROWS) @ (Z_ROWS, N_pad) matmul produces
    # y(t).  Column index = e*K*G_pad + k*G_pad + g (same (e,k,g) order as
    # torch's reshape); column bias_row holds the bias; padded columns are 0.
    w_p = jnp.zeros((F, E, K, G_pad), jnp.float32)
    w_p = w_p.at[:, :, :, :G].set(weight.astype(jnp.float32))
    h_aug = jnp.zeros((F_pad, Z_ROWS), jnp.float32)
    h_aug = h_aug.at[:F, :bias_row].set(w_p.reshape(F, bias_row))
    if bias is not None:
        h_aug = h_aug.at[:F, bias_row].set(bias[:, 0].astype(jnp.float32))

    kernel = functools.partial(
        gf_db_kernel, E=E, K=K, g_pad=G_pad, stride_e=stride_e,
        bias_row=bias_row, n_sub=n_sub, t_blk=t_blk, s_dtype=s_dtype)

    y_pad = pl.pallas_call(
        kernel,
        out_shape=jax.ShapeDtypeStruct((B, T_pad, F_pad, N_pad), x_dtype),
        grid_spec=pltpu.PrefetchScalarGridSpec(
            num_scalar_prefetch=0,
            grid=(B, T_pad // t_blk),          # time innermost = the recurrence
            in_specs=[
                pl.BlockSpec((None, t_blk, G_pad, N_pad),
                             lambda b, tb: (b, tb, 0, 0)),
                pl.BlockSpec((None, t_blk, E, n_sub, N_pad),
                             lambda b, tb: (b, tb, 0, 0, 0)),
                pl.BlockSpec((F_pad, Z_ROWS), lambda b, tb: (0, 0)),
            ],
            out_specs=pl.BlockSpec((None, t_blk, F_pad, N_pad),
                                   lambda b, tb: (b, tb, 0, 0)),
            scratch_shapes=[pltpu.VMEM((Z_ROWS, N_pad), jnp.float32)],
        ),
        compiler_params=pltpu.CompilerParams(
            dimension_semantics=("parallel", "arbitrary"),
            vmem_limit_bytes=vmem_limit,
        ),
    )(x_p, S_p, h_aug)

    return y_pad[:, :T, :F, :N]


def lsigf_db_reference(h, S, x, b=None):
    """Pure-JAX reference matching the PyTorch LSIGF_DB exactly."""
    B, T, G, N = x.shape
    F, E, K, _ = h.shape
    xk = jnp.broadcast_to(x[:, :, None, :, :], (B, T, E, G, N))
    zs = [xk]
    for _ in range(1, K):
        xk = jnp.concatenate(
            [jnp.zeros((B, 1, E, G, N), xk.dtype), xk[:, : T - 1]], axis=1)
        xk = jnp.einsum("btegn,btenm->btegm", xk, S)
        zs.append(xk)
    z = jnp.stack(zs, axis=2)              # (B, T, K, E, G, N)
    y = jnp.einsum("fekg,btkegn->btfn", h, z)
    if b is not None:
        y = y + b                          # (F, 1) broadcasts over (B, T, F, N)
    return y


if __name__ == "__main__":
    # Small, module-consistent shapes.
    B, T, E, K, G, F, N = 2, 8, 1, 3, 4, 8, 16

    key = jax.random.PRNGKey(0)
    kw, kb, kx, ks = jax.random.split(key, 4)

    # Deterministic parameter init matching reset_parameters().
    stdv = 1.0 / math.sqrt(G * K)
    weight = jax.random.uniform(
        kw, (F, E, K, G), jnp.float32, minval=-stdv, maxval=stdv)
    bias = jax.random.uniform(
        kb, (F, 1), jnp.float32, minval=-stdv, maxval=stdv)
    x = jax.random.normal(kx, (B, T, G, N), jnp.float32)
    S = jax.random.normal(ks, (B, T, E, N, N), jnp.float32)

    y_ref = lsigf_db_reference(weight, S, x, bias)
    y_ref_nb = lsigf_db_reference(weight, S, x, None)

    # 1) f32 S path (exactness anchor), auto T_BLK.
    f32_fn = jax.jit(functools.partial(graph_filter_db, s_dtype=jnp.float32))
    y_f32 = jax.block_until_ready(f32_fn(x, S, weight, bias))
    assert y_f32.shape == (B, T, F, N)
    assert jnp.allclose(y_f32, y_ref, atol=1e-4, rtol=1e-4), \
        "mismatch vs reference (f32, bias)"

    # 2) default bf16 S path, explicit T_BLK=3 (T=8 not divisible -> exercises
    #    T padding and the z carry across T-blocks).  Looser tolerance because
    #    the GSO is streamed in bf16 (f32 accumulation).
    bf16_fn = jax.jit(functools.partial(graph_filter_db, t_blk=3))
    y_bf16 = jax.block_until_ready(bf16_fn(x, S, weight, bias))
    rel = jnp.linalg.norm(y_bf16 - y_ref) / jnp.linalg.norm(y_ref)
    assert y_bf16.shape == (B, T, F, N)
    assert rel < 3e-2, f"bf16-S relative error too large: {rel}"

    # 3) no-bias variant (API parity with bias=None in the PyTorch module).
    nb_fn = jax.jit(functools.partial(graph_filter_db, s_dtype=jnp.float32))
    y_nb = jax.block_until_ready(nb_fn(x, S, weight, None))
    assert jnp.allclose(y_nb, y_ref_nb, atol=1e-4, rtol=1e-4), \
        "mismatch vs reference (no bias)"

    print("KERNEL_OK")
</pallas_src>

<mosaic_0001>
module attributes {stable_mosaic.version = 11 : i64} {
  func.func @gf_db_kernel(%arg0: i32, %arg1: i32, %arg2: memref<1x8x8x128xf32, #tpu.memory_space<vmem>>, %arg3: memref<1x8x1x16x128xf32, #tpu.memory_space<vmem>>, %arg4: memref<8x32xf32, #tpu.memory_space<vmem>>, %arg5: memref<1x8x8x128xf32, #tpu.memory_space<vmem>>, %arg6: memref<32x128xf32, #tpu.memory_space<vmem>>) attributes {dimension_semantics = [#tpu.dimension_semantics<parallel>, #tpu.dimension_semantics<arbitrary>], iteration_bounds = array<i64: 2, 1>, scalar_prefetch = 0 : i64, scratch_operands = 1 : i64, tpu.core_type = #tpu.core_type<tc>, window_params = [{transform_indices = @transform_0, window_bounds = array<i64: 1, 8, 8, 128>}, {transform_indices = @transform_1, window_bounds = array<i64: 1, 8, 1, 16, 128>}, {pipeline_mode = #tpu.pipeline_mode<synchronous>, transform_indices = @transform_2, window_bounds = array<i64: 8, 32>}, {transform_indices = @transform_3, window_bounds = array<i64: 1, 8, 8, 128>}]} {
    %c0_i32 = arith.constant 0 : i32
    %0 = arith.cmpi eq, %arg1, %c0_i32 : i32
    %1 = arith.extui %0 : i1 to i32
    %c0_i32_0 = arith.constant 0 : i32
    %2 = arith.cmpi ne, %1, %c0_i32_0 : i32
    scf.if %2 {
      %148 = tpu.iota {dimensions = array<i32: 0>} : vector<32x128xi32>
      %c24_i32 = arith.constant 24 : i32
      %149 = vector.broadcast %c24_i32 : i32 to vector<32x128xi32>
      %150 = arith.cmpi eq, %148, %149 : vector<32x128xi32>
      %cst_146 = arith.constant 1.000000e+00 : f32
      %cst_147 = arith.constant 0.000000e+00 : f32
      %151 = vector.broadcast %cst_146 : f32 to vector<32x128xf32>
      %152 = vector.broadcast %cst_147 : f32 to vector<32x128xf32>
      %153 = arith.select %150, %151, %152 : vector<32x128xi1>, vector<32x128xf32>
      %c0_148 = arith.constant 0 : index
      %c0_149 = arith.constant 0 : index
      %154 = vector.load %arg6[%c0_148, %c0_149] : memref<32x128xf32, #tpu.memory_space<vmem>>, vector<32x128xf32>
      tpu.vector_store %arg6[%c0_148, %c0_149], %153 {strides = array<i32>} : memref<32x128xf32, #tpu.memory_space<vmem>>, vector<32x128xf32>,
    } else {
    }
    %c0 = arith.constant 0 : index
    %c0_1 = arith.constant 0 : index
    %3 = vector.load %arg4[%c0, %c0_1] : memref<8x32xf32, #tpu.memory_space<vmem>>, vector<8x32xf32>
    %c0_i32_2 = arith.constant 0 : i32
    %c0_3 = arith.constant 0 : index
    %4 = arith.index_cast %c0_i32_2 : i32 to index
    %c0_4 = arith.constant 0 : index
    %c0_5 = arith.constant 0 : index
    %5 = vector.load %arg2[%c0_3, %4, %c0_4, %c0_5] : memref<1x8x8x128xf32, #tpu.memory_space<vmem>>, vector<1x1x8x128xf32>
    %6 = vector.shape_cast %5 : vector<1x1x8x128xf32> to vector<8x128xf32>
    %c0_6 = arith.constant 0 : index
    %7 = arith.index_cast %c0_i32_2 : i32 to index
    %c0_7 = arith.constant 0 : index
    %c0_8 = arith.constant 0 : index
    %c0_9 = arith.constant 0 : index
    %8 = vector.load %arg3[%c0_6, %7, %c0_7, %c0_8, %c0_9] : memref<1x8x1x16x128xf32, #tpu.memory_space<vmem>>, vector<1x1x1x16x128xf32>
    %9 = vector.shape_cast %8 : vector<1x1x1x16x128xf32> to vector<1x16x128xf32>
    %c0_10 = arith.constant 0 : index
    %c0_11 = arith.constant 0 : index
    %10 = vector.load %arg6[%c0_10, %c0_11] : memref<32x128xf32, #tpu.memory_space<vmem>>, vector<16x128xf32>
    %11 = vector.extract_strided_slice %10 {offsets = [0, 0], sizes = [16, 16], strides = [1, 1]} : vector<16x128xf32> to vector<16x16xf32>
    %12 = vector.shape_cast %9 : vector<1x16x128xf32> to vector<16x128xf32>
    %cst = arith.constant dense<0.000000e+00> : vector<16x128xf32>
    %13 = tpu.matmul %11, %12, %cst {dimension_numbers = #tpu.dot_dimension_numbers<[1], [0], [0], [1], [0, 0, 1, 1], [], []>} : vector<16x16xf32>, vector<16x128xf32>, vector<16x128xf32> -> vector<16x128xf32>
    %14 = tpu.concatenate %6, %13 in 0 : vector<8x128xf32>, vector<16x128xf32> -> vector<24x128xf32>
    %c0_12 = arith.constant 0 : index
    %c0_13 = arith.constant 0 : index
    %15 = vector.load %arg6[%c0_12, %c0_13] : memref<32x128xf32, #tpu.memory_space<vmem>>, vector<24x128xf32>
    tpu.vector_store %arg6[%c0_12, %c0_13], %14 {strides = array<i32>} : memref<32x128xf32, #tpu.memory_space<vmem>>, vector<24x128xf32>,
    %c0_14 = arith.constant 0 : index
    %c0_15 = arith.constant 0 : index
    %16 = vector.load %arg6[%c0_14, %c0_15] : memref<32x128xf32, #tpu.memory_space<vmem>>, vector<32x128xf32>
    %cst_16 = arith.constant dense<0.000000e+00> : vector<8x128xf32>
    %17 = tpu.matmul %3, %16, %cst_16 {dimension_numbers = #tpu.dot_dimension_numbers<[1], [0], [0], [1], [0, 0, 1, 1], [], []>} : vector<8x32xf32>, vector<32x128xf32>, vector<8x128xf32> -> vector<8x128xf32>
    %c0_17 = arith.constant 0 : index
    %18 = arith.index_cast %c0_i32_2 : i32 to index
    %c0_18 = arith.constant 0 : index
    %c0_19 = arith.constant 0 : index
    %19 = vector.load %arg5[%c0_17, %18, %c0_18, %c0_19] : memref<1x8x8x128xf32, #tpu.memory_space<vmem>>, vector<1x1x8x128xf32>
    %20 = vector.shape_cast %19 : vector<1x1x8x128xf32> to vector<8x128xf32>
    %21 = vector.shape_cast %17 : vector<8x128xf32> to vector<1x1x8x128xf32>
    tpu.vector_store %arg5[%c0_17, %18, %c0_18, %c0_19], %21 {strides = array<i32>} : memref<1x8x8x128xf32, #tpu.memory_space<vmem>>, vector<1x1x8x128xf32>,
    %c1_i32 = arith.constant 1 : i32
    %c0_20 = arith.constant 0 : index
    %22 = arith.index_cast %c1_i32 : i32 to index
    %c0_21 = arith.constant 0 : index
    %c0_22 = arith.constant 0 : index
    %23 = vector.load %arg2[%c0_20, %22, %c0_21, %c0_22] : memref<1x8x8x128xf32, #tpu.memory_space<vmem>>, vector<1x1x8x128xf32>
    %24 = vector.shape_cast %23 : vector<1x1x8x128xf32> to vector<8x128xf32>
    %c0_23 = arith.constant 0 : index
    %25 = arith.index_cast %c1_i32 : i32 to index
    %c0_24 = arith.constant 0 : index
    %c0_25 = arith.constant 0 : index
    %c0_26 = arith.constant 0 : index
    %26 = vector.load %arg3[%c0_23, %25, %c0_24, %c0_25, %c0_26] : memref<1x8x1x16x128xf32, #tpu.memory_space<vmem>>, vector<1x1x1x16x128xf32>
    %27 = vector.shape_cast %26 : vector<1x1x1x16x128xf32> to vector<1x16x128xf32>
    %c0_27 = arith.constant 0 : index
    %c0_28 = arith.constant 0 : index
    %28 = vector.load %arg6[%c0_27, %c0_28] : memref<32x128xf32, #tpu.memory_space<vmem>>, vector<16x128xf32>
    %29 = vector.extract_strided_slice %28 {offsets = [0, 0], sizes = [16, 16], strides = [1, 1]} : vector<16x128xf32> to vector<16x16xf32>
    %30 = vector.shape_cast %27 : vector<1x16x128xf32> to vector<16x128xf32>
    %cst_29 = arith.constant dense<0.000000e+00> : vector<16x128xf32>
    %31 = tpu.matmul %29, %30, %cst_29 {dimension_numbers = #tpu.dot_dimension_numbers<[1], [0], [0], [1], [0, 0, 1, 1], [], []>} : vector<16x16xf32>, vector<16x128xf32>, vector<16x128xf32> -> vector<16x128xf32>
    %32 = tpu.concatenate %24, %31 in 0 : vector<8x128xf32>, vector<16x128xf32> -> vector<24x128xf32>
    %c0_30 = arith.constant 0 : index
    %c0_31 = arith.constant 0 : index
    %33 = vector.load %arg6[%c0_30, %c0_31] : memref<32x128xf32, #tpu.memory_space<vmem>>, vector<24x128xf32>
    tpu.vector_store %arg6[%c0_30, %c0_31], %32 {strides = array<i32>} : memref<32x128xf32, #tpu.memory_space<vmem>>, vector<24x128xf32>,
    %c0_32 = arith.constant 0 : index
    %c0_33 = arith.constant 0 : index
    %34 = vector.load %arg6[%c0_32, %c0_33] : memref<32x128xf32, #tpu.memory_space<vmem>>, vector<32x128xf32>
    %cst_34 = arith.constant dense<0.000000e+00> : vector<8x128xf32>
    %35 = tpu.matmul %3, %34, %cst_34 {dimension_numbers = #tpu.dot_dimension_numbers<[1], [0], [0], [1], [0, 0, 1, 1], [], []>} : vector<8x32xf32>, vector<32x128xf32>, vector<8x128xf32> -> vector<8x128xf32>
    %c0_35 = arith.constant 0 : index
    %36 = arith.index_cast %c1_i32 : i32 to index
    %c0_36 = arith.constant 0 : index
    %c0_37 = arith.constant 0 : index
    %37 = vector.load %arg5[%c0_35, %36, %c0_36, %c0_37] : memref<1x8x8x128xf32, #tpu.memory_space<vmem>>, vector<1x1x8x128xf32>
    %38 = vector.shape_cast %37 : vector<1x1x8x128xf32> to vector<8x128xf32>
    %39 = vector.shape_cast %35 : vector<8x128xf32> to vector<1x1x8x128xf32>
    tpu.vector_store %arg5[%c0_35, %36, %c0_36, %c0_37], %39 {strides = array<i32>} : memref<1x8x8x128xf32, #tpu.memory_space<vmem>>, vector<1x1x8x128xf32>,
    %c2_i32 = arith.constant 2 : i32
    %c0_38 = arith.constant 0 : index
    %40 = arith.index_cast %c2_i32 : i32 to index
    %c0_39 = arith.constant 0 : index
    %c0_40 = arith.constant 0 : index
    %41 = vector.load %arg2[%c0_38, %40, %c0_39, %c0_40] : memref<1x8x8x128xf32, #tpu.memory_space<vmem>>, vector<1x1x8x128xf32>
    %42 = vector.shape_cast %41 : vector<1x1x8x128xf32> to vector<8x128xf32>
    %c0_41 = arith.constant 0 : index
    %43 = arith.index_cast %c2_i32 : i32 to index
    %c0_42 = arith.constant 0 : index
    %c0_43 = arith.constant 0 : index
    %c0_44 = arith.constant 0 : index
    %44 = vector.load %arg3[%c0_41, %43, %c0_42, %c0_43, %c0_44] : memref<1x8x1x16x128xf32, #tpu.memory_space<vmem>>, vector<1x1x1x16x128xf32>
    %45 = vector.shape_cast %44 : vector<1x1x1x16x128xf32> to vector<1x16x128xf32>
    %c0_45 = arith.constant 0 : index
    %c0_46 = arith.constant 0 : index
    %46 = vector.load %arg6[%c0_45, %c0_46] : memref<32x128xf32, #tpu.memory_space<vmem>>, vector<16x128xf32>
    %47 = vector.extract_strided_slice %46 {offsets = [0, 0], sizes = [16, 16], strides = [1, 1]} : vector<16x128xf32> to vector<16x16xf32>
    %48 = vector.shape_cast %45 : vector<1x16x128xf32> to vector<16x128xf32>
    %cst_47 = arith.constant dense<0.000000e+00> : vector<16x128xf32>
    %49 = tpu.matmul %47, %48, %cst_47 {dimension_numbers = #tpu.dot_dimension_numbers<[1], [0], [0], [1], [0, 0, 1, 1], [], []>} : vector<16x16xf32>, vector<16x128xf32>, vector<16x128xf32> -> vector<16x128xf32>
    %50 = tpu.concatenate %42, %49 in 0 : vector<8x128xf32>, vector<16x128xf32> -> vector<24x128xf32>
    %c0_48 = arith.constant 0 : index
    %c0_49 = arith.constant 0 : index
    %51 = vector.load %arg6[%c0_48, %c0_49] : memref<32x128xf32, #tpu.memory_space<vmem>>, vector<24x128xf32>
    tpu.vector_store %arg6[%c0_48, %c0_49], %50 {strides = array<i32>} : memref<32x128xf32, #tpu.memory_space<vmem>>, vector<24x128xf32>,
    %c0_50 = arith.constant 0 : index
    %c0_51 = arith.constant 0 : index
    %52 = vector.load %arg6[%c0_50, %c0_51] : memref<32x128xf32, #tpu.memory_space<vmem>>, vector<32x128xf32>
    %cst_52 = arith.constant dense<0.000000e+00> : vector<8x128xf32>
    %53 = tpu.matmul %3, %52, %cst_52 {dimension_numbers = #tpu.dot_dimension_numbers<[1], [0], [0], [1], [0, 0, 1, 1], [], []>} : vector<8x32xf32>, vector<32x128xf32>, vector<8x128xf32> -> vector<8x128xf32>
    %c0_53 = arith.constant 0 : index
    %54 = arith.index_cast %c2_i32 : i32 to index
    %c0_54 = arith.constant 0 : index
    %c0_55 = arith.constant 0 : index
    %55 = vector.load %arg5[%c0_53, %54, %c0_54, %c0_55] : memref<1x8x8x128xf32, #tpu.memory_space<vmem>>, vector<1x1x8x128xf32>
    %56 = vector.shape_cast %55 : vector<1x1x8x128xf32> to vector<8x128xf32>
    %57 = vector.shape_cast %53 : vector<8x128xf32> to vector<1x1x8x128xf32>
    tpu.vector_store %arg5[%c0_53, %54, %c0_54, %c0_55], %57 {strides = array<i32>} : memref<1x8x8x128xf32, #tpu.memory_space<vmem>>, vector<1x1x8x128xf32>,
    %c3_i32 = arith.constant 3 : i32
    %c0_56 = arith.constant 0 : index
    %58 = arith.index_cast %c3_i32 : i32 to index
    %c0_57 = arith.constant 0 : index
    %c0_58 = arith.constant 0 : index
    %59 = vector.load %arg2[%c0_56, %58, %c0_57, %c0_58] : memref<1x8x8x128xf32, #tpu.memory_space<vmem>>, vector<1x1x8x128xf32>
    %60 = vector.shape_cast %59 : vector<1x1x8x128xf32> to vector<8x128xf32>
    %c0_59 = arith.constant 0 : index
    %61 = arith.index_cast %c3_i32 : i32 to index
    %c0_60 = arith.constant 0 : index
    %c0_61 = arith.constant 0 : index
    %c0_62 = arith.constant 0 : index
    %62 = vector.load %arg3[%c0_59, %61, %c0_60, %c0_61, %c0_62] : memref<1x8x1x16x128xf32, #tpu.memory_space<vmem>>, vector<1x1x1x16x128xf32>
    %63 = vector.shape_cast %62 : vector<1x1x1x16x128xf32> to vector<1x16x128xf32>
    %c0_63 = arith.constant 0 : index
    %c0_64 = arith.constant 0 : index
    %64 = vector.load %arg6[%c0_63, %c0_64] : memref<32x128xf32, #tpu.memory_space<vmem>>, vector<16x128xf32>
    %65 = vector.extract_strided_slice %64 {offsets = [0, 0], sizes = [16, 16], strides = [1, 1]} : vector<16x128xf32> to vector<16x16xf32>
    %66 = vector.shape_cast %63 : vector<1x16x128xf32> to vector<16x128xf32>
    %cst_65 = arith.constant dense<0.000000e+00> : vector<16x128xf32>
    %67 = tpu.matmul %65, %66, %cst_65 {dimension_numbers = #tpu.dot_dimension_numbers<[1], [0], [0], [1], [0, 0, 1, 1], [], []>} : vector<16x16xf32>, vector<16x128xf32>, vector<16x128xf32> -> vector<16x128xf32>
    %68 = tpu.concatenate %60, %67 in 0 : vector<8x128xf32>, vector<16x128xf32> -> vector<24x128xf32>
    %c0_66 = arith.constant 0 : index
    %c0_67 = arith.constant 0 : index
    %69 = vector.load %arg6[%c0_66, %c0_67] : memref<32x128xf32, #tpu.memory_space<vmem>>, vector<24x128xf32>
    tpu.vector_store %arg6[%c0_66, %c0_67], %68 {strides = array<i32>} : memref<32x128xf32, #tpu.memory_space<vmem>>, vector<24x128xf32>,
    %c0_68 = arith.constant 0 : index
    %c0_69 = arith.constant 0 : index
    %70 = vector.load %arg6[%c0_68, %c0_69] : memref<32x128xf32, #tpu.memory_space<vmem>>, vector<32x128xf32>
    %cst_70 = arith.constant dense<0.000000e+00> : vector<8x128xf32>
    %71 = tpu.matmul %3, %70, %cst_70 {dimension_numbers = #tpu.dot_dimension_numbers<[1], [0], [0], [1], [0, 0, 1, 1], [], []>} : vector<8x32xf32>, vector<32x128xf32>, vector<8x128xf32> -> vector<8x128xf32>
    %c0_71 = arith.constant 0 : index
    %72 = arith.index_cast %c3_i32 : i32 to index
    %c0_72 = arith.constant 0 : index
    %c0_73 = arith.constant 0 : index
    %73 = vector.load %arg5[%c0_71, %72, %c0_72, %c0_73] : memref<1x8x8x128xf32, #tpu.memory_space<vmem>>, vector<1x1x8x128xf32>
    %74 = vector.shape_cast %73 : vector<1x1x8x128xf32> to vector<8x128xf32>
    %75 = vector.shape_cast %71 : vector<8x128xf32> to vector<1x1x8x128xf32>
    tpu.vector_store %arg5[%c0_71, %72, %c0_72, %c0_73], %75 {strides = array<i32>} : memref<1x8x8x128xf32, #tpu.memory_space<vmem>>, vector<1x1x8x128xf32>,
    %c4_i32 = arith.constant 4 : i32
    %c0_74 = arith.constant 0 : index
    %76 = arith.index_cast %c4_i32 : i32 to index
    %c0_75 = arith.constant 0 : index
    %c0_76 = arith.constant 0 : index
    %77 = vector.load %arg2[%c0_74, %76, %c0_75, %c0_76] : memref<1x8x8x128xf32, #tpu.memory_space<vmem>>, vector<1x1x8x128xf32>
    %78 = vector.shape_cast %77 : vector<1x1x8x128xf32> to vector<8x128xf32>
    %c0_77 = arith.constant 0 : index
    %79 = arith.index_cast %c4_i32 : i32 to index
    %c0_78 = arith.constant 0 : index
    %c0_79 = arith.constant 0 : index
    %c0_80 = arith.constant 0 : index
    %80 = vector.load %arg3[%c0_77, %79, %c0_78, %c0_79, %c0_80] : memref<1x8x1x16x128xf32, #tpu.memory_space<vmem>>, vector<1x1x1x16x128xf32>
    %81 = vector.shape_cast %80 : vector<1x1x1x16x128xf32> to vector<1x16x128xf32>
    %c0_81 = arith.constant 0 : index
    %c0_82 = arith.constant 0 : index
    %82 = vector.load %arg6[%c0_81, %c0_82] : memref<32x128xf32, #tpu.memory_space<vmem>>, vector<16x128xf32>
    %83 = vector.extract_strided_slice %82 {offsets = [0, 0], sizes = [16, 16], strides = [1, 1]} : vector<16x128xf32> to vector<16x16xf32>
    %84 = vector.shape_cast %81 : vector<1x16x128xf32> to vector<16x128xf32>
    %cst_83 = arith.constant dense<0.000000e+00> : vector<16x128xf32>
    %85 = tpu.matmul %83, %84, %cst_83 {dimension_numbers = #tpu.dot_dimension_numbers<[1], [0], [0], [1], [0, 0, 1, 1], [], []>} : vector<16x16xf32>, vector<16x128xf32>, vector<16x128xf32> -> vector<16x128xf32>
    %86 = tpu.concatenate %78, %85 in 0 : vector<8x128xf32>, vector<16x128xf32> -> vector<24x128xf32>
    %c0_84 = arith.constant 0 : index
    %c0_85 = arith.constant 0 : index
    %87 = vector.load %arg6[%c0_84, %c0_85] : memref<32x128xf32, #tpu.memory_space<vmem>>, vector<24x128xf32>
    tpu.vector_store %arg6[%c0_84, %c0_85], %86 {strides = array<i32>} : memref<32x128xf32, #tpu.memory_space<vmem>>, vector<24x128xf32>,
    %c0_86 = arith.constant 0 : index
    %c0_87 = arith.constant 0 : index
    %88 = vector.load %arg6[%c0_86, %c0_87] : memref<32x128xf32, #tpu.memory_space<vmem>>, vector<32x128xf32>
    %cst_88 = arith.constant dense<0.000000e+00> : vector<8x128xf32>
    %89 = tpu.matmul %3, %88, %cst_88 {dimension_numbers = #tpu.dot_dimension_numbers<[1], [0], [0], [1], [0, 0, 1, 1], [], []>} : vector<8x32xf32>, vector<32x128xf32>, vector<8x128xf32> -> vector<8x128xf32>
    %c0_89 = arith.constant 0 : index
    %90 = arith.index_cast %c4_i32 : i32 to index
    %c0_90 = arith.constant 0 : index
    %c0_91 = arith.constant 0 : index
    %91 = vector.load %arg5[%c0_89, %90, %c0_90, %c0_91] : memref<1x8x8x128xf32, #tpu.memory_space<vmem>>, vector<1x1x8x128xf32>
    %92 = vector.shape_cast %91 : vector<1x1x8x128xf32> to vector<8x128xf32>
    %93 = vector.shape_cast %89 : vector<8x128xf32> to vector<1x1x8x128xf32>
    tpu.vector_store %arg5[%c0_89, %90, %c0_90, %c0_91], %93 {strides = array<i32>} : memref<1x8x8x128xf32, #tpu.memory_space<vmem>>, vector<1x1x8x128xf32>,
    %c5_i32 = arith.constant 5 : i32
    %c0_92 = arith.constant 0 : index
    %94 = arith.index_cast %c5_i32 : i32 to index
    %c0_93 = arith.constant 0 : index
    %c0_94 = arith.constant 0 : index
    %95 = vector.load %arg2[%c0_92, %94, %c0_93, %c0_94] : memref<1x8x8x128xf32, #tpu.memory_space<vmem>>, vector<1x1x8x128xf32>
    %96 = vector.shape_cast %95 : vector<1x1x8x128xf32> to vector<8x128xf32>
    %c0_95 = arith.constant 0 : index
    %97 = arith.index_cast %c5_i32 : i32 to index
    %c0_96 = arith.constant 0 : index
    %c0_97 = arith.constant 0 : index
    %c0_98 = arith.constant 0 : index
    %98 = vector.load %arg3[%c0_95, %97, %c0_96, %c0_97, %c0_98] : memref<1x8x1x16x128xf32, #tpu.memory_space<vmem>>, vector<1x1x1x16x128xf32>
    %99 = vector.shape_cast %98 : vector<1x1x1x16x128xf32> to vector<1x16x128xf32>
    %c0_99 = arith.constant 0 : index
    %c0_100 = arith.constant 0 : index
    %100 = vector.load %arg6[%c0_99, %c0_100] : memref<32x128xf32, #tpu.memory_space<vmem>>, vector<16x128xf32>
    %101 = vector.extract_strided_slice %100 {offsets = [0, 0], sizes = [16, 16], strides = [1, 1]} : vector<16x128xf32> to vector<16x16xf32>
    %102 = vector.shape_cast %99 : vector<1x16x128xf32> to vector<16x128xf32>
    %cst_101 = arith.constant dense<0.000000e+00> : vector<16x128xf32>
    %103 = tpu.matmul %101, %102, %cst_101 {dimension_numbers = #tpu.dot_dimension_numbers<[1], [0], [0], [1], [0, 0, 1, 1], [], []>} : vector<16x16xf32>, vector<16x128xf32>, vector<16x128xf32> -> vector<16x128xf32>
    %104 = tpu.concatenate %96, %103 in 0 : vector<8x128xf32>, vector<16x128xf32> -> vector<24x128xf32>
    %c0_102 = arith.constant 0 : index
    %c0_103 = arith.constant 0 : index
    %105 = vector.load %arg6[%c0_102, %c0_103] : memref<32x128xf32, #tpu.memory_space<vmem>>, vector<24x128xf32>
    tpu.vector_store %arg6[%c0_102, %c0_103], %104 {strides = array<i32>} : memref<32x128xf32, #tpu.memory_space<vmem>>, vector<24x128xf32>,
    %c0_104 = arith.constant 0 : index
    %c0_105 = arith.constant 0 : index
    %106 = vector.load %arg6[%c0_104, %c0_105] : memref<32x128xf32, #tpu.memory_space<vmem>>, vector<32x128xf32>
    %cst_106 = arith.constant dense<0.000000e+00> : vector<8x128xf32>
    %107 = tpu.matmul %3, %106, %cst_106 {dimension_numbers = #tpu.dot_dimension_numbers<[1], [0], [0], [1], [0, 0, 1, 1], [], []>} : vector<8x32xf32>, vector<32x128xf32>, vector<8x128xf32> -> vector<8x128xf32>
    %c0_107 = arith.constant 0 : index
    %108 = arith.index_cast %c5_i32 : i32 to index
    %c0_108 = arith.constant 0 : index
    %c0_109 = arith.constant 0 : index
    %109 = vector.load %arg5[%c0_107, %108, %c0_108, %c0_109] : memref<1x8x8x128xf32, #tpu.memory_space<vmem>>, vector<1x1x8x128xf32>
    %110 = vector.shape_cast %109 : vector<1x1x8x128xf32> to vector<8x128xf32>
    %111 = vector.shape_cast %107 : vector<8x128xf32> to vector<1x1x8x128xf32>
    tpu.vector_store %arg5[%c0_107, %108, %c0_108, %c0_109], %111 {strides = array<i32>} : memref<1x8x8x128xf32, #tpu.memory_space<vmem>>, vector<1x1x8x128xf32>,
    %c6_i32 = arith.constant 6 : i32
    %c0_110 = arith.constant 0 : index
    %112 = arith.index_cast %c6_i32 : i32 to index
    %c0_111 = arith.constant 0 : index
    %c0_112 = arith.constant 0 : index
    %113 = vector.load %arg2[%c0_110, %112, %c0_111, %c0_112] : memref<1x8x8x128xf32, #tpu.memory_space<vmem>>, vector<1x1x8x128xf32>
    %114 = vector.shape_cast %113 : vector<1x1x8x128xf32> to vector<8x128xf32>
    %c0_113 = arith.constant 0 : index
    %115 = arith.index_cast %c6_i32 : i32 to index
    %c0_114 = arith.constant 0 : index
    %c0_115 = arith.constant 0 : index
    %c0_116 = arith.constant 0 : index
    %116 = vector.load %arg3[%c0_113, %115, %c0_114, %c0_115, %c0_116] : memref<1x8x1x16x128xf32, #tpu.memory_space<vmem>>, vector<1x1x1x16x128xf32>
    %117 = vector.shape_cast %116 : vector<1x1x1x16x128xf32> to vector<1x16x128xf32>
    %c0_117 = arith.constant 0 : index
    %c0_118 = arith.constant 0 : index
    %118 = vector.load %arg6[%c0_117, %c0_118] : memref<32x128xf32, #tpu.memory_space<vmem>>, vector<16x128xf32>
    %119 = vector.extract_strided_slice %118 {offsets = [0, 0], sizes = [16, 16], strides = [1, 1]} : vector<16x128xf32> to vector<16x16xf32>
    %120 = vector.shape_cast %117 : vector<1x16x128xf32> to vector<16x128xf32>
    %cst_119 = arith.constant dense<0.000000e+00> : vector<16x128xf32>
    %121 = tpu.matmul %119, %120, %cst_119 {dimension_numbers = #tpu.dot_dimension_numbers<[1], [0], [0], [1], [0, 0, 1, 1], [], []>} : vector<16x16xf32>, vector<16x128xf32>, vector<16x128xf32> -> vector<16x128xf32>
    %122 = tpu.concatenate %114, %121 in 0 : vector<8x128xf32>, vector<16x128xf32> -> vector<24x128xf32>
    %c0_120 = arith.constant 0 : index
    %c0_121 = arith.constant 0 : index
    %123 = vector.load %arg6[%c0_120, %c0_121] : memref<32x128xf32, #tpu.memory_space<vmem>>, vector<24x128xf32>
    tpu.vector_store %arg6[%c0_120, %c0_121], %122 {strides = array<i32>} : memref<32x128xf32, #tpu.memory_space<vmem>>, vector<24x128xf32>,
    %c0_122 = arith.constant 0 : index
    %c0_123 = arith.constant 0 : index
    %124 = vector.load %arg6[%c0_122, %c0_123] : memref<32x128xf32, #tpu.memory_space<vmem>>, vector<32x128xf32>
    %cst_124 = arith.constant dense<0.000000e+00> : vector<8x128xf32>
    %125 = tpu.matmul %3, %124, %cst_124 {dimension_numbers = #tpu.dot_dimension_numbers<[1], [0], [0], [1], [0, 0, 1, 1], [], []>} : vector<8x32xf32>, vector<32x128xf32>, vector<8x128xf32> -> vector<8x128xf32>
    %c0_125 = arith.constant 0 : index
    %126 = arith.index_cast %c6_i32 : i32 to index
    %c0_126 = arith.constant 0 : index
    %c0_127 = arith.constant 0 : index
    %127 = vector.load %arg5[%c0_125, %126, %c0_126, %c0_127] : memref<1x8x8x128xf32, #tpu.memory_space<vmem>>, vector<1x1x8x128xf32>
    %128 = vector.shape_cast %127 : vector<1x1x8x128xf32> to vector<8x128xf32>
    %129 = vector.shape_cast %125 : vector<8x128xf32> to vector<1x1x8x128xf32>
    tpu.vector_store %arg5[%c0_125, %126, %c0_126, %c0_127], %129 {strides = array<i32>} : memref<1x8x8x128xf32, #tpu.memory_space<vmem>>, vector<1x1x8x128xf32>,
    %c7_i32 = arith.constant 7 : i32
    %c0_128 = arith.constant 0 : index
    %130 = arith.index_cast %c7_i32 : i32 to index
    %c0_129 = arith.constant 0 : index
    %c0_130 = arith.constant 0 : index
    %131 = vector.load %arg2[%c0_128, %130, %c0_129, %c0_130] : memref<1x8x8x128xf32, #tpu.memory_space<vmem>>, vector<1x1x8x128xf32>
    %132 = vector.shape_cast %131 : vector<1x1x8x128xf32> to vector<8x128xf32>
    %c0_131 = arith.constant 0 : index
    %133 = arith.index_cast %c7_i32 : i32 to index
    %c0_132 = arith.constant 0 : index
    %c0_133 = arith.constant 0 : index
    %c0_134 = arith.constant 0 : index
    %134 = vector.load %arg3[%c0_131, %133, %c0_132, %c0_133, %c0_134] : memref<1x8x1x16x128xf32, #tpu.memory_space<vmem>>, vector<1x1x1x16x128xf32>
    %135 = vector.shape_cast %134 : vector<1x1x1x16x128xf32> to vector<1x16x128xf32>
    %c0_135 = arith.constant 0 : index
    %c0_136 = arith.constant 0 : index
    %136 = vector.load %arg6[%c0_135, %c0_136] : memref<32x128xf32, #tpu.memory_space<vmem>>, vector<16x128xf32>
    %137 = vector.extract_strided_slice %136 {offsets = [0, 0], sizes = [16, 16], strides = [1, 1]} : vector<16x128xf32> to vector<16x16xf32>
    %138 = vector.shape_cast %135 : vector<1x16x128xf32> to vector<16x128xf32>
    %cst_137 = arith.constant dense<0.000000e+00> : vector<16x128xf32>
    %139 = tpu.matmul %137, %138, %cst_137 {dimension_numbers = #tpu.dot_dimension_numbers<[1], [0], [0], [1], [0, 0, 1, 1], [], []>} : vector<16x16xf32>, vector<16x128xf32>, vector<16x128xf32> -> vector<16x128xf32>
    %140 = tpu.concatenate %132, %139 in 0 : vector<8x128xf32>, vector<16x128xf32> -> vector<24x128xf32>
    %c0_138 = arith.constant 0 : index
    %c0_139 = arith.constant 0 : index
    %141 = vector.load %arg6[%c0_138, %c0_139] : memref<32x128xf32, #tpu.memory_space<vmem>>, vector<24x128xf32>
    tpu.vector_store %arg6[%c0_138, %c0_139], %140 {strides = array<i32>} : memref<32x128xf32, #tpu.memory_space<vmem>>, vector<24x128xf32>,
    %c0_140 = arith.constant 0 : index
    %c0_141 = arith.constant 0 : index
    %142 = vector.load %arg6[%c0_140, %c0_141] : memref<32x128xf32, #tpu.memory_space<vmem>>, vector<32x128xf32>
    %cst_142 = arith.constant dense<0.000000e+00> : vector<8x128xf32>
    %143 = tpu.matmul %3, %142, %cst_142 {dimension_numbers = #tpu.dot_dimension_numbers<[1], [0], [0], [1], [0, 0, 1, 1], [], []>} : vector<8x32xf32>, vector<32x128xf32>, vector<8x128xf32> -> vector<8x128xf32>
    %c0_143 = arith.constant 0 : index
    %144 = arith.index_cast %c7_i32 : i32 to index
    %c0_144 = arith.constant 0 : index
    %c0_145 = arith.constant 0 : index
    %145 = vector.load %arg5[%c0_143, %144, %c0_144, %c0_145] : memref<1x8x8x128xf32, #tpu.memory_space<vmem>>, vector<1x1x8x128xf32>
    %146 = vector.shape_cast %145 : vector<1x1x8x128xf32> to vector<8x128xf32>
    %147 = vector.shape_cast %143 : vector<8x128xf32> to vector<1x1x8x128xf32>
    tpu.vector_store %arg5[%c0_143, %144, %c0_144, %c0_145], %147 {strides = array<i32>} : memref<1x8x8x128xf32, #tpu.memory_space<vmem>>, vector<1x1x8x128xf32>,
    %c8_i32 = arith.constant 8 : i32
    return
  }
  func.func @transform_0(%arg0: i32, %arg1: i32) -> (i32, i32, i32, i32) {
    %c0_i32 = arith.constant 0 : i32
    %c0_i32_0 = arith.constant 0 : i32
    %c0_i32_1 = arith.constant 0 : i32
    return %arg0, %arg1, %c0_i32, %c0_i32_0 : i32, i32, i32, i32
  }
  func.func @transform_1(%arg0: i32, %arg1: i32) -> (i32, i32, i32, i32, i32) {
    %c0_i32 = arith.constant 0 : i32
    %c0_i32_0 = arith.constant 0 : i32
    %c0_i32_1 = arith.constant 0 : i32
    %c0_i32_2 = arith.constant 0 : i32
    return %arg0, %arg1, %c0_i32, %c0_i32_0, %c0_i32_1 : i32, i32, i32, i32, i32
  }
  func.func @transform_2(%arg0: i32, %arg1: i32) -> (i32, i32) {
    %c0_i32 = arith.constant 0 : i32
    %c0_i32_0 = arith.constant 0 : i32
    %c0_i32_1 = arith.constant 0 : i32
    return %c0_i32, %c0_i32_0 : i32, i32
  }
  func.func @transform_3(%arg0: i32, %arg1: i32) -> (i32, i32, i32, i32) {
    %c0_i32 = arith.constant 0 : i32
    %c0_i32_0 = arith.constant 0 : i32
    %c0_i32_1 = arith.constant 0 : i32
    return %arg0, %arg1, %c0_i32, %c0_i32_0 : i32, i32, i32, i32
  }
}

</mosaic_0001>

<llo_original>
// kernel: graph_filter_db.1
$region0: #{graph_filter_db.1}
  #allocation0 [shape = 'u32[]', space=smem, size = 0x4, offset = 0x4, fixed_abs, tag = 'smem constant byte address 0x4 - core index']
  #allocation1 [shape = 'u32[144,128]{1,0:T(1,128)}', space=vmem, size = 0x12000, scoped, tag = 'internal scratch']
  #allocation2 [shape = 'f32[32,128]{1,0:T(8,128)}', space=vmem, size = 0x4000, scoped, tag = 'scratch operand']
  %s0 = inlined_call_operand.vmem [shape: f32[2,8,8,128], index: 0, kind: input, shape index: {}]
  %s1 = inlined_call_operand.vmem [shape: f32[2,8,1,16,128], index: 1, kind: input, shape index: {}]
  %s2 = inlined_call_operand.vmem [shape: f32[8,32], index: 2, kind: input, shape index: {}]
  %s3 = inlined_call_operand.hbm [shape: f32[2,8,8,128], index: 3, kind: output, shape index: {}]
  %s4 = sld [smem:[#allocation0]]
  $region49: #{graph_filter_db.1} parent=0
    _
  %s6 = ssub.s32 1, %s4
  %s7 = scalar_select 0, %s6, %s4
  $region1: #{graph_filter_db.1} parent=0
    #allocation3 [shape = 'u8[65536]{0}', space=vmem, size = 0x10000, scoped, tag = 'output window, operand 0']
    #allocation4 [shape = 's32[2]{0}', space=sflag, size = 0x8, scoped, tag = 'scoped memory for graph_filter_db.1']
    %8 = vsyncpa [#allocation4], 0
    %s9 = scalar_lea.sflag [#allocation4], 1
    %10 = vsyncpa %s9, 0
    loop: start=0, step=1, limit=4
    $region2: #{graph_filter_db.1} parent=1 // loop_pre_header
      _
    $region3: #{graph_filter_db.1} parent=1 // loop_header
      %s12 = sphi 0, %s16
      %p13 = scmp.ge.s32.totalorder %s12, 4
      %s19 = sphi 0, %s31
      %s20 = sphi 0, %s27
      %s21 = sphi 0, %s19
      %s22 = sphi 0, %s20
      %s23 = sphi 0, %s21
      %s24 = sphi 0, %s22
      %s36 = sphi 0, %s38
      %s39 = sphi 0, %s36
      %s40 = sphi 0, %s39
      %s56 = sphi 0, %s40
      %s64 = sphi 0, %s66
      %s67 = sphi 0, %s64
      %s68 = sphi 0, %s67
      %s84 = sphi 0, %s68
      %s88 = sphi 0, %s88
      %s90 = sphi 0, %s88
      %s91 = sphi 0, %s90
      %s105 = sphi 0, %s91
      %s113 = sphi 0, %s115
      %s116 = sphi 0, %s113
      %s117 = sphi 0, %s116
      %s133 = sphi 0, %s117
    $region4: #{graph_filter_db.1} parent=1 // loop_header_branch
      %15 = sbr.rel (%p13) target = $region8
    $region5: #{graph_filter_db.1} parent=1 // loop_body
      %s17 = ssub.s32 %s12, 1
      %s18 = ssub.s32 %s12, 2
      %s25 = sadd.s32 1, %s20
      %p26 = scmp.ge.s32.totalorder %s25, 1
      %s27 = scalar_select %p26, 0, %s25
      %s28 = sadd.s32 1, %s19
      %s29 = scalar_select %p26, %s28, %s19
      %p30 = scmp.ge.s32.totalorder %s29, 2
      %s31 = scalar_select %p30, 0, %s29
      %s32 = ssub.s32 %s19, %s31
      %s33 = ssub.s32 %s20, %s27
      %s34 = sor.u32 %s32, %s33
      %p35 = scmp.eq.s32.totalorder %s34, 0
      %s37 = sadd.s32 %s36, 1
      %s38 = scalar_select %p35, %s36, %s37
      %p41 = pneg %p35
      %p42 = scmp.eq.s32.totalorder %s12, 1
      %p43 = por %p41, %p42
      %p44 = scmp.ne.s32.totalorder %s36, %s39
      %p45 = scmp.eq.s32.totalorder %s12, 0
      %p46 = por %p44, %p45
      %p47 = scmp.ne.s32.totalorder %s36, %s39
      %p48 = scmp.eq.s32.totalorder %s17, 1
      %p49 = por %p47, %p48
      %p50 = scmp.ne.s32.totalorder %s39, %s40
      %p51 = scmp.eq.s32.totalorder %s17, 0
      %p52 = por %p50, %p51
      %p53 = scmp.ne.s32.totalorder %s39, %s40
      %p54 = scmp.eq.s32.totalorder %s18, 1
      %p55 = por %p53, %p54
      %p57 = scmp.ne.s32.totalorder %s40, %s56
      %p58 = scmp.eq.s32.totalorder %s18, 0
      %p59 = por %p57, %p58
      %s60 = ssub.s32 %s19, %s31
      %s61 = ssub.s32 %s20, %s27
      %s62 = sor.u32 %s60, %s61
      %p63 = scmp.eq.s32.totalorder %s62, 0
      %s65 = sadd.s32 %s64, 1
      %s66 = scalar_select %p63, %s64, %s65
      %p69 = pneg %p63
      %p70 = scmp.eq.s32.totalorder %s12, 1
      %p71 = por %p69, %p70
      %p72 = scmp.ne.s32.totalorder %s64, %s67
      %p73 = scmp.eq.s32.totalorder %s12, 0
      %p74 = por %p72, %p73
      %p75 = scmp.ne.s32.totalorder %s64, %s67
      %p76 = scmp.eq.s32.totalorder %s17, 1
      %p77 = por %p75, %p76
      %p78 = scmp.ne.s32.totalorder %s67, %s68
      %p79 = scmp.eq.s32.totalorder %s17, 0
      %p80 = por %p78, %p79
      %p81 = scmp.ne.s32.totalorder %s67, %s68
      %p82 = scmp.eq.s32.totalorder %s18, 1
      %p83 = por %p81, %p82
      %p85 = scmp.ne.s32.totalorder %s68, %s84
      %p86 = scmp.eq.s32.totalorder %s18, 0
      %p87 = por %p85, %p86
      %s89 = sadd.s32 %s88, 1
      %p92 = scmp.eq.s32.totalorder %s12, 1
      %p93 = scmp.ne.s32.totalorder %s88, %s90
      %p94 = scmp.eq.s32.totalorder %s12, 0
      %p95 = por %p93, %p94
      %p96 = scmp.ne.s32.totalorder %s88, %s90
      %p97 = scmp.eq.s32.totalorder %s17, 1
      %p98 = por %p96, %p97
      %p99 = scmp.ne.s32.totalorder %s90, %s91
      %p100 = scmp.eq.s32.totalorder %s17, 0
      %p101 = por %p99, %p100
      %p102 = scmp.ne.s32.totalorder %s90, %s91
      %p103 = scmp.eq.s32.totalorder %s18, 1
      %p104 = por %p102, %p103
      %p106 = scmp.ne.s32.totalorder %s91, %s105
      %p107 = scmp.eq.s32.totalorder %s18, 0
      %p108 = por %p106, %p107
      %s109 = ssub.s32 %s19, %s31
      %s110 = ssub.s32 %s20, %s27
      %s111 = sor.u32 %s109, %s110
      %p112 = scmp.eq.s32.totalorder %s111, 0
      %s114 = sadd.s32 %s113, 1
      %s115 = scalar_select %p112, %s113, %s114
      %p118 = pneg %p112
      %p119 = scmp.eq.s32.totalorder %s12, 1
      %p120 = por %p118, %p119
      %p121 = scmp.ne.s32.totalorder %s113, %s116
      %p122 = scmp.eq.s32.totalorder %s12, 0
      %p123 = por %p121, %p122
      %p124 = scmp.ne.s32.totalorder %s113, %s116
      %p125 = scmp.eq.s32.totalorder %s17, 1
      %p126 = por %p124, %p125
      %p127 = scmp.ne.s32.totalorder %s116, %s117
      %p128 = scmp.eq.s32.totalorder %s17, 0
      %p129 = por %p127, %p128
      %p130 = scmp.ne.s32.totalorder %s116, %s117
      %p131 = scmp.eq.s32.totalorder %s18, 1
      %p132 = por %p130, %p131
      %p134 = scmp.ne.s32.totalorder %s117, %s133
      %p135 = scmp.eq.s32.totalorder %s18, 0
      %p136 = por %p134, %p135
      %p137 = scmp.le.s32.totalorder 1, %s12
      %p138 = scmp.lt.s32.totalorder %s12, 3
      %p139 = pnand %p137, %p138
      %p140 = pneg %p139
      // Predicated region
      $region9: #{graph_filter_db.1} parent=5 // pred_check
        _
      $region10: #{graph_filter_db.1} parent=5 // pred_check_branch
        %142 = sbr.rel (%p139) target = $region12
      $region11: #{graph_filter_db.1} parent=5 // pred_region
        %s143 = ssub.s32 %s12, 1
        // Predicated region
        $region13: #{graph_filter_db.1} parent=11 // pred_check
          %p144 = pneg %p101
        $region14: #{graph_filter_db.1} parent=11 // pred_check_branch
          %146 = sbr.rel (%p144) target = $region16
        $region15: #{graph_filter_db.1} parent=11 // pred_region
          _
        $region16: #{graph_filter_db.1} parent=11 // pred_fallthru
          _
      $region12: #{graph_filter_db.1} parent=5 // pred_fallthru
        _
      %p147 = scmp.lt.s32.totalorder %s12, 2
      // Predicated region
      $region17: #{graph_filter_db.1} parent=5 // pred_check
        %p148 = pneg %p147
      $region18: #{graph_filter_db.1} parent=5 // pred_check_branch
        %150 = sbr.rel (%p148) target = $region20
      $region19: #{graph_filter_db.1} parent=5 // pred_region
        // Predicated region
        $region21: #{graph_filter_db.1} parent=19 // pred_check
          %p151 = pneg %p46
        $region22: #{graph_filter_db.1} parent=19 // pred_check_branch
          %153 = sbr.rel (%p151) target = $region24
        $region23: #{graph_filter_db.1} parent=19 // pred_region
          %s154 = smul.u32 8, %s20
          %p155 = scmp.lt.s32.totalorder %s19, 1
          %s156 = scalar_select %p155, %s19, 1
          %p157 = scmp.lt.s32.totalorder %s154, 7
          %s158 = scalar_select %p157, %s154, 7
          %s159 = smul.addr %s156, 8
          %s160 = sadd.s32 %s158, %s159
          %s161 = smul.addr %s160, 8
          %s162 = scalar_lea.vmem %s0, %s161
          %s163 = smul.u32 8, %s20
        $region24: #{graph_filter_db.1} parent=19 // pred_fallthru
          _
        // Predicated region
        $region25: #{graph_filter_db.1} parent=19 // pred_check
          %p164 = pneg %p74
        $region26: #{graph_filter_db.1} parent=19 // pred_check_branch
          %166 = sbr.rel (%p164) target = $region28
        $region27: #{graph_filter_db.1} parent=19 // pred_region
          %s167 = smul.u32 8, %s20
          %p168 = scmp.lt.s32.totalorder %s19, 1
          %s169 = scalar_select %p168, %s19, 1
          %p170 = scmp.lt.s32.totalorder %s167, 7
          %s171 = scalar_select %p170, %s167, 7
          %s172 = smul.addr %s171, 2
          %s173 = smul.addr %s169, 16
          %s174 = sadd.s32 %s172, %s173
          %s175 = smul.addr %s174, 8
          %s176 = scalar_lea.vmem %s1, %s175
          %s177 = smul.u32 8, %s20
        $region28: #{graph_filter_db.1} parent=19 // pred_fallthru
          _
      $region20: #{graph_filter_db.1} parent=5 // pred_fallthru
        _
      %p178 = scmp.le.s32.totalorder 1, %s12
      %p179 = scmp.lt.s32.totalorder %s12, 3
      %p180 = pnand %p178, %p179
      %p181 = pneg %p180
      // Predicated region
      $region29: #{graph_filter_db.1} parent=5 // pred_check
        _
      $region30: #{graph_filter_db.1} parent=5 // pred_check_branch
        %183 = sbr.rel (%p180) target = $region32
      $region31: #{graph_filter_db.1} parent=5 // pred_region
        %s184 = ssub.s32 %s12, 1
        %s185 = smul.u32 8, %s22
        %p186 = scmp.lt.s32.totalorder %s21, 1
        %s187 = scalar_select %p186, %s21, 1
        %p188 = scmp.lt.s32.totalorder %s185, 7
        %s189 = scalar_select %p188, %s185, 7
        %s190 = smul.addr %s187, 8
        %s191 = sadd.s32 %s189, %s190
        %s192 = smul.addr %s191, 8
        %s193 = scalar_lea.vmem %s0, %s192
        %p194 = pneg %p52
        %p195 = pneg %p49
        %s196 = smul.u32 8, %s22
        %p197 = scmp.lt.s32.totalorder %s21, 1
        %s198 = scalar_select %p197, %s21, 1
        %p199 = scmp.lt.s32.totalorder %s196, 7
        %s200 = scalar_select %p199, %s196, 7
        %s201 = smul.addr %s200, 2
        %s202 = smul.addr %s198, 16
        %s203 = sadd.s32 %s201, %s202
        %s204 = smul.addr %s203, 8
        %s205 = scalar_lea.vmem %s1, %s204
        %p206 = pneg %p80
        %p207 = pneg %p77
        %p208 = pneg %p101
        %p209 = pneg %p98
        %p210 = pneg %p129
        %p211 = pneg %p126
        %s212 = sand.u32 %s116, 1
        %s213 = scalar_lea.sflag [#allocation4], %s212
        %s214 = sand.u32 %s116, 1
        %s215 = smul.addr %s214, 64
        %s216 = scalar_lea.vmem [#allocation3], %s215
        %s217 = smul.u32 8, %s22
        %p218 = scmp.lt.s32.totalorder %s21, 1
        %s219 = scalar_select %p218, %s21, 1
        %p220 = scmp.lt.s32.totalorder %s217, 7
        %s221 = scalar_select %p220, %s217, 7
        %s222 = smul.addr %s219, 8
        %s223 = sadd.s32 %s221, %s222
        %s224 = smul.addr %s223, 8
        %s225 = scalar_lea.vmem %s0, %s224
        %s226 = smul.u32 8, %s22
        %s227 = smul.u32 8, %s22
        %p228 = scmp.lt.s32.totalorder %s21, 1
        %s229 = scalar_select %p228, %s21, 1
        %p230 = scmp.lt.s32.totalorder %s227, 7
        %s231 = scalar_select %p230, %s227, 7
        %s232 = smul.addr %s231, 2
        %s233 = smul.addr %s229, 16
        %s234 = sadd.s32 %s232, %s233
        %s235 = smul.addr %s234, 8
        %s236 = scalar_lea.vmem %s1, %s235
        %s237 = smul.u32 8, %s22
        %s238 = smul.u32 8, %s22
        %p239 = scmp.eq.s32.totalorder %s22, 0
        // Predicated region
        $region33: #{graph_filter_db.1} parent=31 // pred_check
          %p240 = pneg %p239
        $region34: #{graph_filter_db.1} parent=31 // pred_check_branch
          %242 = sbr.rel (%p240) target = $region36
        $region35: #{graph_filter_db.1} parent=31 // pred_region
          %v243 = vlaneseq
          %v244 = vshrl.u32 %v243, 7
          %v245 = vadd.s32 %v244, 8
          %v246 = vadd.s32 %v244, 16
          %v247 = vadd.s32 %v244, 24
          %vm248 = vcmp.eq.s32.totalorder %v244, 24
          %vm249 = vcmp.eq.s32.totalorder %v245, 24
          %vm250 = vcmp.eq.s32.totalorder %v246, 24
          %vm251 = vcmp.eq.s32.totalorder %v247, 24
          %v252 = vsel %vm248, 1.0, 0.0
          %v253 = vsel %vm249, 1.0, 0.0
          %v254 = vsel %vm250, 1.0, 0.0
          %v255 = vsel %vm251, 1.0, 0.0
          %256 = vst [vmem:[#allocation2] sm:$0xff] %v252
          %257 = vst [vmem:[#allocation2 + $0x8] sm:$0xff] %v253
          %258 = vst [vmem:[#allocation2 + $0x10] sm:$0xff] %v254
          %259 = vst [vmem:[#allocation2 + $0x18] sm:$0xff] %v255
        $region36: #{graph_filter_db.1} parent=31 // pred_fallthru
          _
        %v260 = vld [vmem:[%s2] sm:$0xff]
        %v261 = vld [vmem:[%s225] sm:$0xff]
        %v262 = vld [vmem:[%s236] sm:$0xff]
        %v263 = vld [vmem:[%s236 + $0x8] sm:$0xff]
        %v264 = vld [vmem:[#allocation2] sm:$0xff]
        %v265 = vld [vmem:[#allocation2 + $0x8] sm:$0xff]
        %vm266 = vcmask 130048
        %v268 = vsel %vm266, %v264, 0
        %v271 = vsel %vm266, %v265, 0
        %273 = vmatprep.subr.mxu0 0.0
        %274 = vmatpush1.msra.mxu0 %v262
        %275 = vmatprep.subr.mxu0 0.0
        %276 = vmatpush1.msra.mxu0 %v263
        %277 = vmatprep.subr.mxu0 0.0
        %278 = vmatpush1.msra.mxu0 0.0
        %279 = vmatprep.subr.mxu0 0.0
        %280 = vmatpush1.msra.mxu0 0.0
        %281 = vmatprep.subr.mxu0 0.0
        %282 = vmatpush1.msra.mxu0 0.0
        %283 = vmatprep.subr.mxu0 0.0
        %284 = vmatpush1.msra.mxu0 0.0
        %285 = vmatprep.subr.mxu0 0.0
        %286 = vmatpush1.msra.mxu0 0.0
        %287 = vmatprep.subr.mxu0 0.0
        %288 = vmatpush1.msra.mxu0 0.0
        %289 = vmatprep.subr.mxu0 0.0
        %290 = vmatpush1.msra.mxu0 0.0
        %291 = vmatprep.subr.mxu0 0.0
        %292 = vmatpush1.msra.mxu0 0.0
        %293 = vmatprep.subr.mxu0 0.0
        %294 = vmatpush1.msra.mxu0 0.0
        %295 = vmatprep.subr.mxu0 0.0
        %296 = vmatpush1.msra.mxu0 0.0
        %297 = vmatprep.subr.mxu0 0.0
        %298 = vmatpush1.msra.mxu0 0.0
        %299 = vmatprep.subr.mxu0 0.0
        %300 = vmatpush1.msra.mxu0 0.0
        %301 = vmatprep.subr.mxu0 0.0
        %302 = vmatpush1.msra.mxu0 0.0
        %303 = vmatprep.subr.mxu0 0.0
        %304 = vmatpush1.msra.mxu0 0.0
        %305 = vmatprep.subr.mxu0 0.0
        %306 = vmatpush1.msra.mxu0 0.0
        %307 = vmatprep.subr.mxu0 0.0
        %308 = vmatpush1.msra.mxu0 0.0
        %309 = vmatprep.subr.mxu0 0.0
        %310 = vmatpush1.msra.mxu0 0.0
        %311 = vmatprep.subr.mxu0 0.0
        %312 = vmatpush1.msra.mxu0 0.0
        %313 = vmatprep.subr.mxu0 0.0
        %314 = vmatpush1.msra.mxu0 0.0
        %315 = vmatprep.subr.mxu0 0.0
        %316 = vmatpush1.msra.mxu0 0.0
        %317 = vmatprep.subr.mxu0 0.0
        %318 = vmatpush1.msra.mxu0 0.0
        %319 = vmatprep.subr.mxu0 0.0
        %320 = vmatpush1.msra.mxu0 0.0
        %321 = vmatprep.subr.mxu0 0.0
        %322 = vmatpush1.msra.mxu0 0.0
        %323 = vmatprep.subr.mxu0 0.0
        %324 = vmatpush1.msra.mxu0 0.0
        %325 = vmatprep.subr.mxu0 0.0
        %326 = vmatpush1.msra.mxu0 0.0
        %327 = vmatprep.subr.mxu0 0.0
        %328 = vmatpush1.msra.mxu0 0.0
        %329 = vmatprep.subr.mxu0 0.0
        %330 = vmatpush1.msra.mxu0 0.0
        %331 = vmatprep.subr.mxu0 0.0
        %332 = vmatpush1.msra.mxu0 0.0
        %333 = vmatprep.subr.mxu0 0.0
        %334 = vmatpush1.msra.mxu0 0.0
        %335 = vmatprep.subr.mxu0 0.0
        %336 = vmatpush1.msra.mxu0 0.0
        %337 = vmatprep.mubr.f32.mxu0 0.0
        %338 = vmatmul.mubr.f32.gmra.mrb[0].mxu0 %v268
        %v339 = vpop.f32.mrb[0].mxu0
        %v340 = vadd.f32 0.0, %v339
        %v341 = vpop.f32.mrb[0].mxu0
        %342 = vmatprep.mubr.f32.mxu0 0.0
        %343 = vmatmul.mubr.f32.gmra.mrb[0].mxu0 %v271
        %v344 = vpop.f32.mrb[0].mxu0
        %v345 = vadd.f32 0.0, %v344
        %v346 = vpop.f32.mrb[0].mxu0
        %347 = vdwg.mxu0
        %348 = vst [vmem:[#allocation2] sm:$0xff] %v261
        %349 = vst [vmem:[#allocation2 + $0x8] sm:$0xff] %v340
        %350 = vst [vmem:[#allocation2 + $0x10] sm:$0xff] %v345
        %v351 = vld [vmem:[#allocation2] sm:$0xff]
        %v352 = vld [vmem:[#allocation2 + $0x8] sm:$0xff]
        %v353 = vld [vmem:[#allocation2 + $0x10] sm:$0xff]
        %v354 = vld [vmem:[#allocation2 + $0x18] sm:$0xff]
        %vm355 = vcmask 261120
        %v357 = vsel %vm355, %v260, 0
        %359 = vmatprep.subr.mxu0 0.0
        %360 = vmatpush1.msra.mxu0 %v351
        %361 = vmatprep.subr.mxu0 0.0
        %362 = vmatpush1.msra.mxu0 %v352
        %363 = vmatprep.subr.mxu0 0.0
        %364 = vmatpush1.msra.mxu0 %v353
        %365 = vmatprep.subr.mxu0 0.0
        %366 = vmatpush1.msra.mxu0 %v354
        %367 = vmatprep.subr.mxu0 0.0
        %368 = vmatpush1.msra.mxu0 0.0
        %369 = vmatprep.subr.mxu0 0.0
        %370 = vmatpush1.msra.mxu0 0.0
        %371 = vmatprep.subr.mxu0 0.0
        %372 = vmatpush1.msra.mxu0 0.0
        %373 = vmatprep.subr.mxu0 0.0
        %374 = vmatpush1.msra.mxu0 0.0
        %375 = vmatprep.subr.mxu0 0.0
        %376 = vmatpush1.msra.mxu0 0.0
        %377 = vmatprep.subr.mxu0 0.0
        %378 = vmatpush1.msra.mxu0 0.0
        %379 = vmatprep.subr.mxu0 0.0
        %380 = vmatpush1.msra.mxu0 0.0
        %381 = vmatprep.subr.mxu0 0.0
        %382 = vmatpush1.msra.mxu0 0.0
        %383 = vmatprep.subr.mxu0 0.0
        %384 = vmatpush1.msra.mxu0 0.0
        %385 = vmatprep.subr.mxu0 0.0
        %386 = vmatpush1.msra.mxu0 0.0
        %387 = vmatprep.subr.mxu0 0.0
        %388 = vmatpush1.msra.mxu0 0.0
        %389 = vmatprep.subr.mxu0 0.0
        %390 = vmatpush1.msra.mxu0 0.0
        %391 = vmatprep.subr.mxu0 0.0
        %392 = vmatpush1.msra.mxu0 0.0
        %393 = vmatprep.subr.mxu0 0.0
        %394 = vmatpush1.msra.mxu0 0.0
        %395 = vmatprep.subr.mxu0 0.0
        %396 = vmatpush1.msra.mxu0 0.0
        %397 = vmatprep.subr.mxu0 0.0
        %398 = vmatpush1.msra.mxu0 0.0
        %399 = vmatprep.subr.mxu0 0.0
        %400 = vmatpush1.msra.mxu0 0.0
        %401 = vmatprep.subr.mxu0 0.0
        %402 = vmatpush1.msra.mxu0 0.0
        %403 = vmatprep.subr.mxu0 0.0
        %404 = vmatpush1.msra.mxu0 0.0
        %405 = vmatprep.subr.mxu0 0.0
        %406 = vmatpush1.msra.mxu0 0.0
        %407 = vmatprep.subr.mxu0 0.0
        %408 = vmatpush1.msra.mxu0 0.0
        %409 = vmatprep.subr.mxu0 0.0
        %410 = vmatpush1.msra.mxu0 0.0
        %411 = vmatprep.subr.mxu0 0.0
        %412 = vmatpush1.msra.mxu0 0.0
        %413 = vmatprep.subr.mxu0 0.0
        %414 = vmatpush1.msra.mxu0 0.0
        %415 = vmatprep.subr.mxu0 0.0
        %416 = vmatpush1.msra.mxu0 0.0
        %417 = vmatprep.subr.mxu0 0.0
        %418 = vmatpush1.msra.mxu0 0.0
        %419 = vmatprep.subr.mxu0 0.0
        %420 = vmatpush1.msra.mxu0 0.0
        %421 = vmatprep.subr.mxu0 0.0
        %422 = vmatpush1.msra.mxu0 0.0
        %423 = vmatprep.mubr.f32.mxu0 0.0
        %424 = vmatmul.mubr.f32.gmra.mrb[0].mxu0 %v357
        %v425 = vpop.f32.mrb[0].mxu0
        %v426 = vadd.f32 0.0, %v425
        %v427 = vpop.f32.mrb[0].mxu0
        %428 = vdwg.mxu0
        %429 = vst [vmem:[%s216] sm:$0xff] %v426
        %s430 = scalar_lea.vmem %s225, 8
        %v431 = vld [vmem:[%s430] sm:$0xff]
        %s432 = scalar_lea.vmem %s236, 16
        %v433 = vld [vmem:[%s432] sm:$0xff]
        %v434 = vld [vmem:[%s432 + $0x8] sm:$0xff]
        %v435 = vld [vmem:[#allocation2] sm:$0xff]
        %v436 = vld [vmem:[#allocation2 + $0x8] sm:$0xff]
        %v438 = vsel %vm266, %v435, 0
        %v441 = vsel %vm266, %v436, 0
        %443 = vmatprep.subr.mxu0 0.0
        %444 = vmatpush1.msra.mxu0 %v433
        %445 = vmatprep.subr.mxu0 0.0
        %446 = vmatpush1.msra.mxu0 %v434
        %447 = vmatprep.subr.mxu0 0.0
        %448 = vmatpush1.msra.mxu0 0.0
        %449 = vmatprep.subr.mxu0 0.0
        %450 = vmatpush1.msra.mxu0 0.0
        %451 = vmatprep.subr.mxu0 0.0
        %452 = vmatpush1.msra.mxu0 0.0
        %453 = vmatprep.subr.mxu0 0.0
        %454 = vmatpush1.msra.mxu0 0.0
        %455 = vmatprep.subr.mxu0 0.0
        %456 = vmatpush1.msra.mxu0 0.0
        %457 = vmatprep.subr.mxu0 0.0
        %458 = vmatpush1.msra.mxu0 0.0
        %459 = vmatprep.subr.mxu0 0.0
        %460 = vmatpush1.msra.mxu0 0.0
        %461 = vmatprep.subr.mxu0 0.0
        %462 = vmatpush1.msra.mxu0 0.0
        %463 = vmatprep.subr.mxu0 0.0
        %464 = vmatpush1.msra.mxu0 0.0
        %465 = vmatprep.subr.mxu0 0.0
        %466 = vmatpush1.msra.mxu0 0.0
        %467 = vmatprep.subr.mxu0 0.0
        %468 = vmatpush1.msra.mxu0 0.0
        %469 = vmatprep.subr.mxu0 0.0
        %470 = vmatpush1.msra.mxu0 0.0
        %471 = vmatprep.subr.mxu0 0.0
        %472 = vmatpush1.msra.mxu0 0.0
        %473 = vmatprep.subr.mxu0 0.0
        %474 = vmatpush1.msra.mxu0 0.0
        %475 = vmatprep.subr.mxu0 0.0
        %476 = vmatpush1.msra.mxu0 0.0
        %477 = vmatprep.subr.mxu0 0.0
        %478 = vmatpush1.msra.mxu0 0.0
        %479 = vmatprep.subr.mxu0 0.0
        %480 = vmatpush1.msra.mxu0 0.0
        %481 = vmatprep.subr.mxu0 0.0
        %482 = vmatpush1.msra.mxu0 0.0
        %483 = vmatprep.subr.mxu0 0.0
        %484 = vmatpush1.msra.mxu0 0.0
        %485 = vmatprep.subr.mxu0 0.0
        %486 = vmatpush1.msra.mxu0 0.0
        %487 = vmatprep.subr.mxu0 0.0
        %488 = vmatpush1.msra.mxu0 0.0
        %489 = vmatprep.subr.mxu0 0.0
        %490 = vmatpush1.msra.mxu0 0.0
        %491 = vmatprep.subr.mxu0 0.0
        %492 = vmatpush1.msra.mxu0 0.0
        %493 = vmatprep.subr.mxu0 0.0
        %494 = vmatpush1.msra.mxu0 0.0
        %495 = vmatprep.subr.mxu0 0.0
        %496 = vmatpush1.msra.mxu0 0.0
        %497 = vmatprep.subr.mxu0 0.0
        %498 = vmatpush1.msra.mxu0 0.0
        %499 = vmatprep.subr.mxu0 0.0
        %500 = vmatpush1.msra.mxu0 0.0
        %501 = vmatprep.subr.mxu0 0.0
        %502 = vmatpush1.msra.mxu0 0.0
        %503 = vmatprep.subr.mxu0 0.0
        %504 = vmatpush1.msra.mxu0 0.0
        %505 = vmatprep.subr.mxu0 0.0
        %506 = vmatpush1.msra.mxu0 0.0
        %507 = vmatprep.mubr.f32.mxu0 0.0
        %508 = vmatmul.mubr.f32.gmra.mrb[0].mxu0 %v438
        %v509 = vpop.f32.mrb[0].mxu0
        %v510 = vadd.f32 0.0, %v509
        %v511 = vpop.f32.mrb[0].mxu0
        %512 = vmatprep.mubr.f32.mxu0 0.0
        %513 = vmatmul.mubr.f32.gmra.mrb[0].mxu0 %v441
        %v514 = vpop.f32.mrb[0].mxu0
        %v515 = vadd.f32 0.0, %v514
        %v516 = vpop.f32.mrb[0].mxu0
        %517 = vdwg.mxu0
        %518 = vst [vmem:[#allocation2] sm:$0xff] %v431
        %519 = vst [vmem:[#allocation2 + $0x8] sm:$0xff] %v510
        %520 = vst [vmem:[#allocation2 + $0x10] sm:$0xff] %v515
        %v521 = vld [vmem:[#allocation2] sm:$0xff]
        %v522 = vld [vmem:[#allocation2 + $0x8] sm:$0xff]
        %v523 = vld [vmem:[#allocation2 + $0x10] sm:$0xff]
        %v524 = vld [vmem:[#allocation2 + $0x18] sm:$0xff]
        %525 = vmatprep.subr.mxu0 0.0
        %526 = vmatpush1.msra.mxu0 %v521
        %527 = vmatprep.subr.mxu0 0.0
        %528 = vmatpush1.msra.mxu0 %v522
        %529 = vmatprep.subr.mxu0 0.0
        %530 = vmatpush1.msra.mxu0 %v523
        %531 = vmatprep.subr.mxu0 0.0
        %532 = vmatpush1.msra.mxu0 %v524
        %533 = vmatprep.subr.mxu0 0.0
        %534 = vmatpush1.msra.mxu0 0.0
        %535 = vmatprep.subr.mxu0 0.0
        %536 = vmatpush1.msra.mxu0 0.0
        %537 = vmatprep.subr.mxu0 0.0
        %538 = vmatpush1.msra.mxu0 0.0
        %539 = vmatprep.subr.mxu0 0.0
        %540 = vmatpush1.msra.mxu0 0.0
        %541 = vmatprep.subr.mxu0 0.0
        %542 = vmatpush1.msra.mxu0 0.0
        %543 = vmatprep.subr.mxu0 0.0
        %544 = vmatpush1.msra.mxu0 0.0
        %545 = vmatprep.subr.mxu0 0.0
        %546 = vmatpush1.msra.mxu0 0.0
        %547 = vmatprep.subr.mxu0 0.0
        %548 = vmatpush1.msra.mxu0 0.0
        %549 = vmatprep.subr.mxu0 0.0
        %550 = vmatpush1.msra.mxu0 0.0
        %551 = vmatprep.subr.mxu0 0.0
        %552 = vmatpush1.msra.mxu0 0.0
        %553 = vmatprep.subr.mxu0 0.0
        %554 = vmatpush1.msra.mxu0 0.0
        %555 = vmatprep.subr.mxu0 0.0
        %556 = vmatpush1.msra.mxu0 0.0
        %557 = vmatprep.subr.mxu0 0.0
        %558 = vmatpush1.msra.mxu0 0.0
        %559 = vmatprep.subr.mxu0 0.0
        %560 = vmatpush1.msra.mxu0 0.0
        %561 = vmatprep.subr.mxu0 0.0
        %562 = vmatpush1.msra.mxu0 0.0
        %563 = vmatprep.subr.mxu0 0.0
        %564 = vmatpush1.msra.mxu0 0.0
        %565 = vmatprep.subr.mxu0 0.0
        %566 = vmatpush1.msra.mxu0 0.0
        %567 = vmatprep.subr.mxu0 0.0
        %568 = vmatpush1.msra.mxu0 0.0
        %569 = vmatprep.subr.mxu0 0.0
        %570 = vmatpush1.msra.mxu0 0.0
        %571 = vmatprep.subr.mxu0 0.0
        %572 = vmatpush1.msra.mxu0 0.0
        %573 = vmatprep.subr.mxu0 0.0
        %574 = vmatpush1.msra.mxu0 0.0
        %575 = vmatprep.subr.mxu0 0.0
        %576 = vmatpush1.msra.mxu0 0.0
        %577 = vmatprep.subr.mxu0 0.0
        %578 = vmatpush1.msra.mxu0 0.0
        %579 = vmatprep.subr.mxu0 0.0
        %580 = vmatpush1.msra.mxu0 0.0
        %581 = vmatprep.subr.mxu0 0.0
        %582 = vmatpush1.msra.mxu0 0.0
        %583 = vmatprep.subr.mxu0 0.0
        %584 = vmatpush1.msra.mxu0 0.0
        %585 = vmatprep.subr.mxu0 0.0
        %586 = vmatpush1.msra.mxu0 0.0
        %587 = vmatprep.subr.mxu0 0.0
        %588 = vmatpush1.msra.mxu0 0.0
        %589 = vmatprep.mubr.f32.mxu0 0.0
        %590 = vmatmul.mubr.f32.gmra.mrb[0].mxu0 %v357
        %v591 = vpop.f32.mrb[0].mxu0
        %v592 = vadd.f32 0.0, %v591
        %v593 = vpop.f32.mrb[0].mxu0
        %594 = vdwg.mxu0
        %s595 = scalar_lea.vmem %s216, 8 [#allocation3]
        %596 = vst [vmem:[%s595] sm:$0xff] %v592
        %s597 = scalar_lea.vmem %s225, 16
        %v598 = vld [vmem:[%s597] sm:$0xff]
        %s599 = scalar_lea.vmem %s236, 32
        %v600 = vld [vmem:[%s599] sm:$0xff]
        %v601 = vld [vmem:[%s599 + $0x8] sm:$0xff]
        %v602 = vld [vmem:[#allocation2] sm:$0xff]
        %v603 = vld [vmem:[#allocation2 + $0x8] sm:$0xff]
        %v605 = vsel %vm266, %v602, 0
        %v608 = vsel %vm266, %v603, 0
        %610 = vmatprep.subr.mxu0 0.0
        %611 = vmatpush1.msra.mxu0 %v600
        %612 = vmatprep.subr.mxu0 0.0
        %613 = vmatpush1.msra.mxu0 %v601
        %614 = vmatprep.subr.mxu0 0.0
        %615 = vmatpush1.msra.mxu0 0.0
        %616 = vmatprep.subr.mxu0 0.0
        %617 = vmatpush1.msra.mxu0 0.0
        %618 = vmatprep.subr.mxu0 0.0
        %619 = vmatpush1.msra.mxu0 0.0
        %620 = vmatprep.subr.mxu0 0.0
        %621 = vmatpush1.msra.mxu0 0.0
        %622 = vmatprep.subr.mxu0 0.0
        %623 = vmatpush1.msra.mxu0 0.0
        %624 = vmatprep.subr.mxu0 0.0
        %625 = vmatpush1.msra.mxu0 0.0
        %626 = vmatprep.subr.mxu0 0.0
        %627 = vmatpush1.msra.mxu0 0.0
        %628 = vmatprep.subr.mxu0 0.0
        %629 = vmatpush1.msra.mxu0 0.0
        %630 = vmatprep.subr.mxu0 0.0
        %631 = vmatpush1.msra.mxu0 0.0
        %632 = vmatprep.subr.mxu0 0.0
        %633 = vmatpush1.msra.mxu0 0.0
        %634 = vmatprep.subr.mxu0 0.0
        %635 = vmatpush1.msra.mxu0 0.0
        %636 = vmatprep.subr.mxu0 0.0
        %637 = vmatpush1.msra.mxu0 0.0
        %638 = vmatprep.subr.mxu0 0.0
        %639 = vmatpush1.msra.mxu0 0.0
        %640 = vmatprep.subr.mxu0 0.0
        %641 = vmatpush1.msra.mxu0 0.0
        %642 = vmatprep.subr.mxu0 0.0
        %643 = vmatpush1.msra.mxu0 0.0
        %644 = vmatprep.subr.mxu0 0.0
        %645 = vmatpush1.msra.mxu0 0.0
        %646 = vmatprep.subr.mxu0 0.0
        %647 = vmatpush1.msra.mxu0 0.0
        %648 = vmatprep.subr.mxu0 0.0
        %649 = vmatpush1.msra.mxu0 0.0
        %650 = vmatprep.subr.mxu0 0.0
        %651 = vmatpush1.msra.mxu0 0.0
        %652 = vmatprep.subr.mxu0 0.0
        %653 = vmatpush1.msra.mxu0 0.0
        %654 = vmatprep.subr.mxu0 0.0
        %655 = vmatpush1.msra.mxu0 0.0
        %656 = vmatprep.subr.mxu0 0.0
        %657 = vmatpush1.msra.mxu0 0.0
        %658 = vmatprep.subr.mxu0 0.0
        %659 = vmatpush1.msra.mxu0 0.0
        %660 = vmatprep.subr.mxu0 0.0
        %661 = vmatpush1.msra.mxu0 0.0
        %662 = vmatprep.subr.mxu0 0.0
        %663 = vmatpush1.msra.mxu0 0.0
        %664 = vmatprep.subr.mxu0 0.0
        %665 = vmatpush1.msra.mxu0 0.0
        %666 = vmatprep.subr.mxu0 0.0
        %667 = vmatpush1.msra.mxu0 0.0
        %668 = vmatprep.subr.mxu0 0.0
        %669 = vmatpush1.msra.mxu0 0.0
        %670 = vmatprep.subr.mxu0 0.0
        %671 = vmatpush1.msra.mxu0 0.0
        %672 = vmatprep.subr.mxu0 0.0
        %673 = vmatpush1.msra.mxu0 0.0
        %674 = vmatprep.mubr.f32.mxu0 0.0
        %675 = vmatmul.mubr.f32.gmra.mrb[0].mxu0 %v605
        %v676 = vpop.f32.mrb[0].mxu0
        %v677 = vadd.f32 0.0, %v676
        %v678 = vpop.f32.mrb[0].mxu0
        %679 = vmatprep.mubr.f32.mxu0 0.0
        %680 = vmatmul.mubr.f32.gmra.mrb[0].mxu0 %v608
        %v681 = vpop.f32.mrb[0].mxu0
        %v682 = vadd.f32 0.0, %v681
        %v683 = vpop.f32.mrb[0].mxu0
        %684 = vdwg.mxu0
        %685 = vst [vmem:[#allocation2] sm:$0xff] %v598
        %686 = vst [vmem:[#allocation2 + $0x8] sm:$0xff] %v677
        %687 = vst [vmem:[#allocation2 + $0x10] sm:$0xff] %v682
        %v688 = vld [vmem:[#allocation2] sm:$0xff]
        %v689 = vld [vmem:[#allocation2 + $0x8] sm:$0xff]
        %v690 = vld [vmem:[#allocation2 + $0x10] sm:$0xff]
        %v691 = vld [vmem:[#allocation2 + $0x18] sm:$0xff]
        %692 = vmatprep.subr.mxu0 0.0
        %693 = vmatpush1.msra.mxu0 %v688
        %694 = vmatprep.subr.mxu0 0.0
        %695 = vmatpush1.msra.mxu0 %v689
        %696 = vmatprep.subr.mxu0 0.0
        %697 = vmatpush1.msra.mxu0 %v690
        %698 = vmatprep.subr.mxu0 0.0
        %699 = vmatpush1.msra.mxu0 %v691
        %700 = vmatprep.subr.mxu0 0.0
        %701 = vmatpush1.msra.mxu0 0.0
        %702 = vmatprep.subr.mxu0 0.0
        %703 = vmatpush1.msra.mxu0 0.0
        %704 = vmatprep.subr.mxu0 0.0
        %705 = vmatpush1.msra.mxu0 0.0
        %706 = vmatprep.subr.mxu0 0.0
        %707 = vmatpush1.msra.mxu0 0.0
        %708 = vmatprep.subr.mxu0 0.0
        %709 = vmatpush1.msra.mxu0 0.0
        %710 = vmatprep.subr.mxu0 0.0
        %711 = vmatpush1.msra.mxu0 0.0
        %712 = vmatprep.subr.mxu0 0.0
        %713 = vmatpush1.msra.mxu0 0.0
        %714 = vmatprep.subr.mxu0 0.0
        %715 = vmatpush1.msra.mxu0 0.0
        %716 = vmatprep.subr.mxu0 0.0
        %717 = vmatpush1.msra.mxu0 0.0
        %718 = vmatprep.subr.mxu0 0.0
        %719 = vmatpush1.msra.mxu0 0.0
        %720 = vmatprep.subr.mxu0 0.0
        %721 = vmatpush1.msra.mxu0 0.0
        %722 = vmatprep.subr.mxu0 0.0
        %723 = vmatpush1.msra.mxu0 0.0
        %724 = vmatprep.subr.mxu0 0.0
        %725 = vmatpush1.msra.mxu0 0.0
        %726 = vmatprep.subr.mxu0 0.0
        %727 = vmatpush1.msra.mxu0 0.0
        %728 = vmatprep.subr.mxu0 0.0
        %729 = vmatpush1.msra.mxu0 0.0
        %730 = vmatprep.subr.mxu0 0.0
        %731 = vmatpush1.msra.mxu0 0.0
        %732 = vmatprep.subr.mxu0 0.0
        %733 = vmatpush1.msra.mxu0 0.0
        %734 = vmatprep.subr.mxu0 0.0
        %735 = vmatpush1.msra.mxu0 0.0
        %736 = vmatprep.subr.mxu0 0.0
        %737 = vmatpush1.msra.mxu0 0.0
        %738 = vmatprep.subr.mxu0 0.0
        %739 = vmatpush1.msra.mxu0 0.0
        %740 = vmatprep.subr.mxu0 0.0
        %741 = vmatpush1.msra.mxu0 0.0
        %742 = vmatprep.subr.mxu0 0.0
        %743 = vmatpush1.msra.mxu0 0.0
        %744 = vmatprep.subr.mxu0 0.0
        %745 = vmatpush1.msra.mxu0 0.0
        %746 = vmatprep.subr.mxu0 0.0
        %747 = vmatpush1.msra.mxu0 0.0
        %748 = vmatprep.subr.mxu0 0.0
        %749 = vmatpush1.msra.mxu0 0.0
        %750 = vmatprep.subr.mxu0 0.0
        %751 = vmatpush1.msra.mxu0 0.0
        %752 = vmatprep.subr.mxu0 0.0
        %753 = vmatpush1.msra.mxu0 0.0
        %754 = vmatprep.subr.mxu0 0.0
        %755 = vmatpush1.msra.mxu0 0.0
        %756 = vmatprep.mubr.f32.mxu0 0.0
        %757 = vmatmul.mubr.f32.gmra.mrb[0].mxu0 %v357
        %v758 = vpop.f32.mrb[0].mxu0
        %v759 = vadd.f32 0.0, %v758
        %v760 = vpop.f32.mrb[0].mxu0
        %761 = vdwg.mxu0
        %s762 = scalar_lea.vmem %s216, 16 [#allocation3]
        %763 = vst [vmem:[%s762] sm:$0xff] %v759
        %s764 = scalar_lea.vmem %s225, 24
        %v765 = vld [vmem:[%s764] sm:$0xff]
        %s766 = scalar_lea.vmem %s236, 48
        %v767 = vld [vmem:[%s766] sm:$0xff]
        %v768 = vld [vmem:[%s766 + $0x8] sm:$0xff]
        %v769 = vld [vmem:[#allocation2] sm:$0xff]
        %v770 = vld [vmem:[#allocation2 + $0x8] sm:$0xff]
        %v772 = vsel %vm266, %v769, 0
        %v775 = vsel %vm266, %v770, 0
        %777 = vmatprep.subr.mxu0 0.0
        %778 = vmatpush1.msra.mxu0 %v767
        %779 = vmatprep.subr.mxu0 0.0
        %780 = vmatpush1.msra.mxu0 %v768
        %781 = vmatprep.subr.mxu0 0.0
        %782 = vmatpush1.msra.mxu0 0.0
        %783 = vmatprep.subr.mxu0 0.0
        %784 = vmatpush1.msra.mxu0 0.0
        %785 = vmatprep.subr.mxu0 0.0
        %786 = vmatpush1.msra.mxu0 0.0
        %787 = vmatprep.subr.mxu0 0.0
        %788 = vmatpush1.msra.mxu0 0.0
        %789 = vmatprep.subr.mxu0 0.0
        %790 = vmatpush1.msra.mxu0 0.0
        %791 = vmatprep.subr.mxu0 0.0
        %792 = vmatpush1.msra.mxu0 0.0
        %793 = vmatprep.subr.mxu0 0.0
        %794 = vmatpush1.msra.mxu0 0.0
        %795 = vmatprep.subr.mxu0 0.0
        %796 = vmatpush1.msra.mxu0 0.0
        %797 = vmatprep.subr.mxu0 0.0
        %798 = vmatpush1.msra.mxu0 0.0
        %799 = vmatprep.subr.mxu0 0.0
        %800 = vmatpush1.msra.mxu0 0.0
        %801 = vmatprep.subr.mxu0 0.0
        %802 = vmatpush1.msra.mxu0 0.0
        %803 = vmatprep.subr.mxu0 0.0
        %804 = vmatpush1.msra.mxu0 0.0
        %805 = vmatprep.subr.mxu0 0.0
        %806 = vmatpush1.msra.mxu0 0.0
        %807 = vmatprep.subr.mxu0 0.0
        %808 = vmatpush1.msra.mxu0 0.0
        %809 = vmatprep.subr.mxu0 0.0
        %810 = vmatpush1.msra.mxu0 0.0
        %811 = vmatprep.subr.mxu0 0.0
        %812 = vmatpush1.msra.mxu0 0.0
        %813 = vmatprep.subr.mxu0 0.0
        %814 = vmatpush1.msra.mxu0 0.0
        %815 = vmatprep.subr.mxu0 0.0
        %816 = vmatpush1.msra.mxu0 0.0
        %817 = vmatprep.subr.mxu0 0.0
        %818 = vmatpush1.msra.mxu0 0.0
        %819 = vmatprep.subr.mxu0 0.0
        %820 = vmatpush1.msra.mxu0 0.0
        %821 = vmatprep.subr.mxu0 0.0
        %822 = vmatpush1.msra.mxu0 0.0
        %823 = vmatprep.subr.mxu0 0.0
        %824 = vmatpush1.msra.mxu0 0.0
        %825 = vmatprep.subr.mxu0 0.0
        %826 = vmatpush1.msra.mxu0 0.0
        %827 = vmatprep.subr.mxu0 0.0
        %828 = vmatpush1.msra.mxu0 0.0
        %829 = vmatprep.subr.mxu0 0.0
        %830 = vmatpush1.msra.mxu0 0.0
        %831 = vmatprep.subr.mxu0 0.0
        %832 = vmatpush1.msra.mxu0 0.0
        %833 = vmatprep.subr.mxu0 0.0
        %834 = vmatpush1.msra.mxu0 0.0
        %835 = vmatprep.subr.mxu0 0.0
        %836 = vmatpush1.msra.mxu0 0.0
        %837 = vmatprep.subr.mxu0 0.0
        %838 = vmatpush1.msra.mxu0 0.0
        %839 = vmatprep.subr.mxu0 0.0
        %840 = vmatpush1.msra.mxu0 0.0
        %841 = vmatprep.mubr.f32.mxu0 0.0
        %842 = vmatmul.mubr.f32.gmra.mrb[0].mxu0 %v772
        %v843 = vpop.f32.mrb[0].mxu0
        %v844 = vadd.f32 0.0, %v843
        %v845 = vpop.f32.mrb[0].mxu0
        %846 = vmatprep.mubr.f32.mxu0 0.0
        %847 = vmatmul.mubr.f32.gmra.mrb[0].mxu0 %v775
        %v848 = vpop.f32.mrb[0].mxu0
        %v849 = vadd.f32 0.0, %v848
        %v850 = vpop.f32.mrb[0].mxu0
        %851 = vdwg.mxu0
        %852 = vst [vmem:[#allocation2] sm:$0xff] %v765
        %853 = vst [vmem:[#allocation2 + $0x8] sm:$0xff] %v844
        %854 = vst [vmem:[#allocation2 + $0x10] sm:$0xff] %v849
        %v855 = vld [vmem:[#allocation2] sm:$0xff]
        %v856 = vld [vmem:[#allocation2 + $0x8] sm:$0xff]
        %v857 = vld [vmem:[#allocation2 + $0x10] sm:$0xff]
        %v858 = vld [vmem:[#allocation2 + $0x18] sm:$0xff]
        %859 = vmatprep.subr.mxu0 0.0
        %860 = vmatpush1.msra.mxu0 %v855
        %861 = vmatprep.subr.mxu0 0.0
        %862 = vmatpush1.msra.mxu0 %v856
        %863 = vmatprep.subr.mxu0 0.0
        %864 = vmatpush1.msra.mxu0 %v857
        %865 = vmatprep.subr.mxu0 0.0
        %866 = vmatpush1.msra.mxu0 %v858
        %867 = vmatprep.subr.mxu0 0.0
        %868 = vmatpush1.msra.mxu0 0.0
        %869 = vmatprep.subr.mxu0 0.0
        %870 = vmatpush1.msra.mxu0 0.0
        %871 = vmatprep.subr.mxu0 0.0
        %872 = vmatpush1.msra.mxu0 0.0
        %873 = vmatprep.subr.mxu0 0.0
        %874 = vmatpush1.msra.mxu0 0.0
        %875 = vmatprep.subr.mxu0 0.0
        %876 = vmatpush1.msra.mxu0 0.0
        %877 = vmatprep.subr.mxu0 0.0
        %878 = vmatpush1.msra.mxu0 0.0
        %879 = vmatprep.subr.mxu0 0.0
        %880 = vmatpush1.msra.mxu0 0.0
        %881 = vmatprep.subr.mxu0 0.0
        %882 = vmatpush1.msra.mxu0 0.0
        %883 = vmatprep.subr.mxu0 0.0
        %884 = vmatpush1.msra.mxu0 0.0
        %885 = vmatprep.subr.mxu0 0.0
        %886 = vmatpush1.msra.mxu0 0.0
        %887 = vmatprep.subr.mxu0 0.0
        %888 = vmatpush1.msra.mxu0 0.0
        %889 = vmatprep.subr.mxu0 0.0
        %890 = vmatpush1.msra.mxu0 0.0
        %891 = vmatprep.subr.mxu0 0.0
        %892 = vmatpush1.msra.mxu0 0.0
        %893 = vmatprep.subr.mxu0 0.0
        %894 = vmatpush1.msra.mxu0 0.0
        %895 = vmatprep.subr.mxu0 0.0
        %896 = vmatpush1.msra.mxu0 0.0
        %897 = vmatprep.subr.mxu0 0.0
        %898 = vmatpush1.msra.mxu0 0.0
        %899 = vmatprep.subr.mxu0 0.0
        %900 = vmatpush1.msra.mxu0 0.0
        %901 = vmatprep.subr.mxu0 0.0
        %902 = vmatpush1.msra.mxu0 0.0
        %903 = vmatprep.subr.mxu0 0.0
        %904 = vmatpush1.msra.mxu0 0.0
        %905 = vmatprep.subr.mxu0 0.0
        %906 = vmatpush1.msra.mxu0 0.0
        %907 = vmatprep.subr.mxu0 0.0
        %908 = vmatpush1.msra.mxu0 0.0
        %909 = vmatprep.subr.mxu0 0.0
        %910 = vmatpush1.msra.mxu0 0.0
        %911 = vmatprep.subr.mxu0 0.0
        %912 = vmatpush1.msra.mxu0 0.0
        %913 = vmatprep.subr.mxu0 0.0
        %914 = vmatpush1.msra.mxu0 0.0
        %915 = vmatprep.subr.mxu0 0.0
        %916 = vmatpush1.msra.mxu0 0.0
        %917 = vmatprep.subr.mxu0 0.0
        %918 = vmatpush1.msra.mxu0 0.0
        %919 = vmatprep.subr.mxu0 0.0
        %920 = vmatpush1.msra.mxu0 0.0
        %921 = vmatprep.subr.mxu0 0.0
        %922 = vmatpush1.msra.mxu0 0.0
        %923 = vmatprep.mubr.f32.mxu0 0.0
        %924 = vmatmul.mubr.f32.gmra.mrb[0].mxu0 %v357
        %v925 = vpop.f32.mrb[0].mxu0
        %v926 = vadd.f32 0.0, %v925
        %v927 = vpop.f32.mrb[0].mxu0
        %928 = vdwg.mxu0
        %s929 = scalar_lea.vmem %s216, 24 [#allocation3]
        %930 = vst [vmem:[%s929] sm:$0xff] %v926
        %s931 = scalar_lea.vmem %s225, 32
        %v932 = vld [vmem:[%s931] sm:$0xff]
        %s933 = scalar_lea.vmem %s236, 64
        %v934 = vld [vmem:[%s933] sm:$0xff]
        %v935 = vld [vmem:[%s933 + $0x8] sm:$0xff]
        %v936 = vld [vmem:[#allocation2] sm:$0xff]
        %v937 = vld [vmem:[#allocation2 + $0x8] sm:$0xff]
        %v939 = vsel %vm266, %v936, 0
        %v942 = vsel %vm266, %v937, 0
        %944 = vmatprep.subr.mxu0 0.0
        %945 = vmatpush1.msra.mxu0 %v934
        %946 = vmatprep.subr.mxu0 0.0
        %947 = vmatpush1.msra.mxu0 %v935
        %948 = vmatprep.subr.mxu0 0.0
        %949 = vmatpush1.msra.mxu0 0.0
        %950 = vmatprep.subr.mxu0 0.0
        %951 = vmatpush1.msra.mxu0 0.0
        %952 = vmatprep.subr.mxu0 0.0
        %953 = vmatpush1.msra.mxu0 0.0
        %954 = vmatprep.subr.mxu0 0.0
        %955 = vmatpush1.msra.mxu0 0.0
        %956 = vmatprep.subr.mxu0 0.0
        %957 = vmatpush1.msra.mxu0 0.0
        %958 = vmatprep.subr.mxu0 0.0
        %959 = vmatpush1.msra.mxu0 0.0
        %960 = vmatprep.subr.mxu0 0.0
        %961 = vmatpush1.msra.mxu0 0.0
        %962 = vmatprep.subr.mxu0 0.0
        %963 = vmatpush1.msra.mxu0 0.0
        %964 = vmatprep.subr.mxu0 0.0
        %965 = vmatpush1.msra.mxu0 0.0
        %966 = vmatprep.subr.mxu0 0.0
        %967 = vmatpush1.msra.mxu0 0.0
        %968 = vmatprep.subr.mxu0 0.0
        %969 = vmatpush1.msra.mxu0 0.0
        %970 = vmatprep.subr.mxu0 0.0
        %971 = vmatpush1.msra.mxu0 0.0
        %972 = vmatprep.subr.mxu0 0.0
        %973 = vmatpush1.msra.mxu0 0.0
        %974 = vmatprep.subr.mxu0 0.0
        %975 = vmatpush1.msra.mxu0 0.0
        %976 = vmatprep.subr.mxu0 0.0
        %977 = vmatpush1.msra.mxu0 0.0
        %978 = vmatprep.subr.mxu0 0.0
        %979 = vmatpush1.msra.mxu0 0.0
        %980 = vmatprep.subr.mxu0 0.0
        %981 = vmatpush1.msra.mxu0 0.0
        %982 = vmatprep.subr.mxu0 0.0
        %983 = vmatpush1.msra.mxu0 0.0
        %984 = vmatprep.subr.mxu0 0.0
        %985 = vmatpush1.msra.mxu0 0.0
        %986 = vmatprep.subr.mxu0 0.0
        %987 = vmatpush1.msra.mxu0 0.0
        %988 = vmatprep.subr.mxu0 0.0
        %989 = vmatpush1.msra.mxu0 0.0
        %990 = vmatprep.subr.mxu0 0.0
        %991 = vmatpush1.msra.mxu0 0.0
        %992 = vmatprep.subr.mxu0 0.0
        %993 = vmatpush1.msra.mxu0 0.0
        %994 = vmatprep.subr.mxu0 0.0
        %995 = vmatpush1.msra.mxu0 0.0
        %996 = vmatprep.subr.mxu0 0.0
        %997 = vmatpush1.msra.mxu0 0.0
        %998 = vmatprep.subr.mxu0 0.0
        %999 = vmatpush1.msra.mxu0 0.0
        %1000 = vmatprep.subr.mxu0 0.0
        %1001 = vmatpush1.msra.mxu0 0.0
        %1002 = vmatprep.subr.mxu0 0.0
        %1003 = vmatpush1.msra.mxu0 0.0
        %1004 = vmatprep.subr.mxu0 0.0
        %1005 = vmatpush1.msra.mxu0 0.0
        %1006 = vmatprep.subr.mxu0 0.0
        %1007 = vmatpush1.msra.mxu0 0.0
        %1008 = vmatprep.mubr.f32.mxu0 0.0
        %1009 = vmatmul.mubr.f32.gmra.mrb[0].mxu0 %v939
        %v1010 = vpop.f32.mrb[0].mxu0
        %v1011 = vadd.f32 0.0, %v1010
        %v1012 = vpop.f32.mrb[0].mxu0
        %1013 = vmatprep.mubr.f32.mxu0 0.0
        %1014 = vmatmul.mubr.f32.gmra.mrb[0].mxu0 %v942
        %v1015 = vpop.f32.mrb[0].mxu0
        %v1016 = vadd.f32 0.0, %v1015
        %v1017 = vpop.f32.mrb[0].mxu0
        %1018 = vdwg.mxu0
        %1019 = vst [vmem:[#allocation2] sm:$0xff] %v932
        %1020 = vst [vmem:[#allocation2 + $0x8] sm:$0xff] %v1011
        %1021 = vst [vmem:[#allocation2 + $0x10] sm:$0xff] %v1016
        %v1022 = vld [vmem:[#allocation2] sm:$0xff]
        %v1023 = vld [vmem:[#allocation2 + $0x8] sm:$0xff]
        %v1024 = vld [vmem:[#allocation2 + $0x10] sm:$0xff]
        %v1025 = vld [vmem:[#allocation2 + $0x18] sm:$0xff]
        %1026 = vmatprep.subr.mxu0 0.0
        %1027 = vmatpush1.msra.mxu0 %v1022
        %1028 = vmatprep.subr.mxu0 0.0
        %1029 = vmatpush1.msra.mxu0 %v1023
        %1030 = vmatprep.subr.mxu0 0.0
        %1031 = vmatpush1.msra.mxu0 %v1024
        %1032 = vmatprep.subr.mxu0 0.0
        %1033 = vmatpush1.msra.mxu0 %v1025
        %1034 = vmatprep.subr.mxu0 0.0
        %1035 = vmatpush1.msra.mxu0 0.0
        %1036 = vmatprep.subr.mxu0 0.0
        %1037 = vmatpush1.msra.mxu0 0.0
        %1038 = vmatprep.subr.mxu0 0.0
        %1039 = vmatpush1.msra.mxu0 0.0
        %1040 = vmatprep.subr.mxu0 0.0
        %1041 = vmatpush1.msra.mxu0 0.0
        %1042 = vmatprep.subr.mxu0 0.0
        %1043 = vmatpush1.msra.mxu0 0.0
        %1044 = vmatprep.subr.mxu0 0.0
        %1045 = vmatpush1.msra.mxu0 0.0
        %1046 = vmatprep.subr.mxu0 0.0
        %1047 = vmatpush1.msra.mxu0 0.0
        %1048 = vmatprep.subr.mxu0 0.0
        %1049 = vmatpush1.msra.mxu0 0.0
        %1050 = vmatprep.subr.mxu0 0.0
        %1051 = vmatpush1.msra.mxu0 0.0
        %1052 = vmatprep.subr.mxu0 0.0
        %1053 = vmatpush1.msra.mxu0 0.0
        %1054 = vmatprep.subr.mxu0 0.0
        %1055 = vmatpush1.msra.mxu0 0.0
        %1056 = vmatprep.subr.mxu0 0.0
        %1057 = vmatpush1.msra.mxu0 0.0
        %1058 = vmatprep.subr.mxu0 0.0
        %1059 = vmatpush1.msra.mxu0 0.0
        %1060 = vmatprep.subr.mxu0 0.0
        %1061 = vmatpush1.msra.mxu0 0.0
        %1062 = vmatprep.subr.mxu0 0.0
        %1063 = vmatpush1.msra.mxu0 0.0
        %1064 = vmatprep.subr.mxu0 0.0
        %1065 = vmatpush1.msra.mxu0 0.0
        %1066 = vmatprep.subr.mxu0 0.0
        %1067 = vmatpush1.msra.mxu0 0.0
        %1068 = vmatprep.subr.mxu0 0.0
        %1069 = vmatpush1.msra.mxu0 0.0
        %1070 = vmatprep.subr.mxu0 0.0
        %1071 = vmatpush1.msra.mxu0 0.0
        %1072 = vmatprep.subr.mxu0 0.0
        %1073 = vmatpush1.msra.mxu0 0.0
        %1074 = vmatprep.subr.mxu0 0.0
        %1075 = vmatpush1.msra.mxu0 0.0
        %1076 = vmatprep.subr.mxu0 0.0
        %1077 = vmatpush1.msra.mxu0 0.0
        %1078 = vmatprep.subr.mxu0 0.0
        %1079 = vmatpush1.msra.mxu0 0.0
        %1080 = vmatprep.subr.mxu0 0.0
        %1081 = vmatpush1.msra.mxu0 0.0
        %1082 = vmatprep.subr.mxu0 0.0
        %1083 = vmatpush1.msra.mxu0 0.0
        %1084 = vmatprep.subr.mxu0 0.0
        %1085 = vmatpush1.msra.mxu0 0.0
        %1086 = vmatprep.subr.mxu0 0.0
        %1087 = vmatpush1.msra.mxu0 0.0
        %1088 = vmatprep.subr.mxu0 0.0
        %1089 = vmatpush1.msra.mxu0 0.0
        %1090 = vmatprep.mubr.f32.mxu0 0.0
        %1091 = vmatmul.mubr.f32.gmra.mrb[0].mxu0 %v357
        %v1092 = vpop.f32.mrb[0].mxu0
        %v1093 = vadd.f32 0.0, %v1092
        %v1094 = vpop.f32.mrb[0].mxu0
        %1095 = vdwg.mxu0
        %s1096 = scalar_lea.vmem %s216, 32 [#allocation3]
        %1097 = vst [vmem:[%s1096] sm:$0xff] %v1093
        %s1098 = scalar_lea.vmem %s225, 40
        %v1099 = vld [vmem:[%s1098] sm:$0xff]
        %s1100 = scalar_lea.vmem %s236, 80
        %v1101 = vld [vmem:[%s1100] sm:$0xff]
        %v1102 = vld [vmem:[%s1100 + $0x8] sm:$0xff]
        %v1103 = vld [vmem:[#allocation2] sm:$0xff]
        %v1104 = vld [vmem:[#allocation2 + $0x8] sm:$0xff]
        %v1106 = vsel %vm266, %v1103, 0
        %v1109 = vsel %vm266, %v1104, 0
        %1111 = vmatprep.subr.mxu0 0.0
        %1112 = vmatpush1.msra.mxu0 %v1101
        %1113 = vmatprep.subr.mxu0 0.0
        %1114 = vmatpush1.msra.mxu0 %v1102
        %1115 = vmatprep.subr.mxu0 0.0
        %1116 = vmatpush1.msra.mxu0 0.0
        %1117 = vmatprep.subr.mxu0 0.0
        %1118 = vmatpush1.msra.mxu0 0.0
        %1119 = vmatprep.subr.mxu0 0.0
        %1120 = vmatpush1.msra.mxu0 0.0
        %1121 = vmatprep.subr.mxu0 0.0
        %1122 = vmatpush1.msra.mxu0 0.0
        %1123 = vmatprep.subr.mxu0 0.0
        %1124 = vmatpush1.msra.mxu0 0.0
        %1125 = vmatprep.subr.mxu0 0.0
        %1126 = vmatpush1.msra.mxu0 0.0
        %1127 = vmatprep.subr.mxu0 0.0
        %1128 = vmatpush1.msra.mxu0 0.0
        %1129 = vmatprep.subr.mxu0 0.0
        %1130 = vmatpush1.msra.mxu0 0.0
        %1131 = vmatprep.subr.mxu0 0.0
        %1132 = vmatpush1.msra.mxu0 0.0
        %1133 = vmatprep.subr.mxu0 0.0
        %1134 = vmatpush1.msra.mxu0 0.0
        %1135 = vmatprep.subr.mxu0 0.0
        %1136 = vmatpush1.msra.mxu0 0.0
        %1137 = vmatprep.subr.mxu0 0.0
        %1138 = vmatpush1.msra.mxu0 0.0
        %1139 = vmatprep.subr.mxu0 0.0
        %1140 = vmatpush1.msra.mxu0 0.0
        %1141 = vmatprep.subr.mxu0 0.0
        %1142 = vmatpush1.msra.mxu0 0.0
        %1143 = vmatprep.subr.mxu0 0.0
        %1144 = vmatpush1.msra.mxu0 0.0
        %1145 = vmatprep.subr.mxu0 0.0
        %1146 = vmatpush1.msra.mxu0 0.0
        %1147 = vmatprep.subr.mxu0 0.0
        %1148 = vmatpush1.msra.mxu0 0.0
        %1149 = vmatprep.subr.mxu0 0.0
        %1150 = vmatpush1.msra.mxu0 0.0
        %1151 = vmatprep.subr.mxu0 0.0
        %1152 = vmatpush1.msra.mxu0 0.0
        %1153 = vmatprep.subr.mxu0 0.0
        %1154 = vmatpush1.msra.mxu0 0.0
        %1155 = vmatprep.subr.mxu0 0.0
        %1156 = vmatpush1.msra.mxu0 0.0
        %1157 = vmatprep.subr.mxu0 0.0
        %1158 = vmatpush1.msra.mxu0 0.0
        %1159 = vmatprep.subr.mxu0 0.0
        %1160 = vmatpush1.msra.mxu0 0.0
        %1161 = vmatprep.subr.mxu0 0.0
        %1162 = vmatpush1.msra.mxu0 0.0
        %1163 = vmatprep.subr.mxu0 0.0
        %1164 = vmatpush1.msra.mxu0 0.0
        %1165 = vmatprep.subr.mxu0 0.0
        %1166 = vmatpush1.msra.mxu0 0.0
        %1167 = vmatprep.subr.mxu0 0.0
        %1168 = vmatpush1.msra.mxu0 0.0
        %1169 = vmatprep.subr.mxu0 0.0
        %1170 = vmatpush1.msra.mxu0 0.0
        %1171 = vmatprep.subr.mxu0 0.0
        %1172 = vmatpush1.msra.mxu0 0.0
        %1173 = vmatprep.subr.mxu0 0.0
        %1174 = vmatpush1.msra.mxu0 0.0
        %1175 = vmatprep.mubr.f32.mxu0 0.0
        %1176 = vmatmul.mubr.f32.gmra.mrb[0].mxu0 %v1106
        %v1177 = vpop.f32.mrb[0].mxu0
        %v1178 = vadd.f32 0.0, %v1177
        %v1179 = vpop.f32.mrb[0].mxu0
        %1180 = vmatprep.mubr.f32.mxu0 0.0
        %1181 = vmatmul.mubr.f32.gmra.mrb[0].mxu0 %v1109
        %v1182 = vpop.f32.mrb[0].mxu0
        %v1183 = vadd.f32 0.0, %v1182
        %v1184 = vpop.f32.mrb[0].mxu0
        %1185 = vdwg.mxu0
        %1186 = vst [vmem:[#allocation2] sm:$0xff] %v1099
        %1187 = vst [vmem:[#allocation2 + $0x8] sm:$0xff] %v1178
        %1188 = vst [vmem:[#allocation2 + $0x10] sm:$0xff] %v1183
        %v1189 = vld [vmem:[#allocation2] sm:$0xff]
        %v1190 = vld [vmem:[#allocation2 + $0x8] sm:$0xff]
        %v1191 = vld [vmem:[#allocation2 + $0x10] sm:$0xff]
        %v1192 = vld [vmem:[#allocation2 + $0x18] sm:$0xff]
        %1193 = vmatprep.subr.mxu0 0.0
        %1194 = vmatpush1.msra.mxu0 %v1189
        %1195 = vmatprep.subr.mxu0 0.0
        %1196 = vmatpush1.msra.mxu0 %v1190
        %1197 = vmatprep.subr.mxu0 0.0
        %1198 = vmatpush1.msra.mxu0 %v1191
        %1199 = vmatprep.subr.mxu0 0.0
        %1200 = vmatpush1.msra.mxu0 %v1192
        %1201 = vmatprep.subr.mxu0 0.0
        %1202 = vmatpush1.msra.mxu0 0.0
        %1203 = vmatprep.subr.mxu0 0.0
        %1204 = vmatpush1.msra.mxu0 0.0
        %1205 = vmatprep.subr.mxu0 0.0
        %1206 = vmatpush1.msra.mxu0 0.0
        %1207 = vmatprep.subr.mxu0 0.0
        %1208 = vmatpush1.msra.mxu0 0.0
        %1209 = vmatprep.subr.mxu0 0.0
        %1210 = vmatpush1.msra.mxu0 0.0
        %1211 = vmatprep.subr.mxu0 0.0
        %1212 = vmatpush1.msra.mxu0 0.0
        %1213 = vmatprep.subr.mxu0 0.0
        %1214 = vmatpush1.msra.mxu0 0.0
        %1215 = vmatprep.subr.mxu0 0.0
        %1216 = vmatpush1.msra.mxu0 0.0
        %1217 = vmatprep.subr.mxu0 0.0
        %1218 = vmatpush1.msra.mxu0 0.0
        %1219 = vmatprep.subr.mxu0 0.0
        %1220 = vmatpush1.msra.mxu0 0.0
        %1221 = vmatprep.subr.mxu0 0.0
        %1222 = vmatpush1.msra.mxu0 0.0
        %1223 = vmatprep.subr.mxu0 0.0
        %1224 = vmatpush1.msra.mxu0 0.0
        %1225 = vmatprep.subr.mxu0 0.0
        %1226 = vmatpush1.msra.mxu0 0.0
        %1227 = vmatprep.subr.mxu0 0.0
        %1228 = vmatpush1.msra.mxu0 0.0
        %1229 = vmatprep.subr.mxu0 0.0
        %1230 = vmatpush1.msra.mxu0 0.0
        %1231 = vmatprep.subr.mxu0 0.0
        %1232 = vmatpush1.msra.mxu0 0.0
        %1233 = vmatprep.subr.mxu0 0.0
        %1234 = vmatpush1.msra.mxu0 0.0
        %1235 = vmatprep.subr.mxu0 0.0
        %1236 = vmatpush1.msra.mxu0 0.0
        %1237 = vmatprep.subr.mxu0 0.0
        %1238 = vmatpush1.msra.mxu0 0.0
        %1239 = vmatprep.subr.mxu0 0.0
        %1240 = vmatpush1.msra.mxu0 0.0
        %1241 = vmatprep.subr.mxu0 0.0
        %1242 = vmatpush1.msra.mxu0 0.0
        %1243 = vmatprep.subr.mxu0 0.0
        %1244 = vmatpush1.msra.mxu0 0.0
        %1245 = vmatprep.subr.mxu0 0.0
        %1246 = vmatpush1.msra.mxu0 0.0
        %1247 = vmatprep.subr.mxu0 0.0
        %1248 = vmatpush1.msra.mxu0 0.0
        %1249 = vmatprep.subr.mxu0 0.0
        %1250 = vmatpush1.msra.mxu0 0.0
        %1251 = vmatprep.subr.mxu0 0.0
        %1252 = vmatpush1.msra.mxu0 0.0
        %1253 = vmatprep.subr.mxu0 0.0
        %1254 = vmatpush1.msra.mxu0 0.0
        %1255 = vmatprep.subr.mxu0 0.0
        %1256 = vmatpush1.msra.mxu0 0.0
        %1257 = vmatprep.mubr.f32.mxu0 0.0
        %1258 = vmatmul.mubr.f32.gmra.mrb[0].mxu0 %v357
        %v1259 = vpop.f32.mrb[0].mxu0
        %v1260 = vadd.f32 0.0, %v1259
        %v1261 = vpop.f32.mrb[0].mxu0
        %1262 = vdwg.mxu0
        %s1263 = scalar_lea.vmem %s216, 40 [#allocation3]
        %1264 = vst [vmem:[%s1263] sm:$0xff] %v1260
        %s1265 = scalar_lea.vmem %s225, 48
        %v1266 = vld [vmem:[%s1265] sm:$0xff]
        %s1267 = scalar_lea.vmem %s236, 96
        %v1268 = vld [vmem:[%s1267] sm:$0xff]
        %v1269 = vld [vmem:[%s1267 + $0x8] sm:$0xff]
        %v1270 = vld [vmem:[#allocation2] sm:$0xff]
        %v1271 = vld [vmem:[#allocation2 + $0x8] sm:$0xff]
        %v1273 = vsel %vm266, %v1270, 0
        %v1276 = vsel %vm266, %v1271, 0
        %1278 = vmatprep.subr.mxu0 0.0
        %1279 = vmatpush1.msra.mxu0 %v1268
        %1280 = vmatprep.subr.mxu0 0.0
        %1281 = vmatpush1.msra.mxu0 %v1269
        %1282 = vmatprep.subr.mxu0 0.0
        %1283 = vmatpush1.msra.mxu0 0.0
        %1284 = vmatprep.subr.mxu0 0.0
        %1285 = vmatpush1.msra.mxu0 0.0
        %1286 = vmatprep.subr.mxu0 0.0
        %1287 = vmatpush1.msra.mxu0 0.0
        %1288 = vmatprep.subr.mxu0 0.0
        %1289 = vmatpush1.msra.mxu0 0.0
        %1290 = vmatprep.subr.mxu0 0.0
        %1291 = vmatpush1.msra.mxu0 0.0
        %1292 = vmatprep.subr.mxu0 0.0
        %1293 = vmatpush1.msra.mxu0 0.0
        %1294 = vmatprep.subr.mxu0 0.0
        %1295 = vmatpush1.msra.mxu0 0.0
        %1296 = vmatprep.subr.mxu0 0.0
        %1297 = vmatpush1.msra.mxu0 0.0
        %1298 = vmatprep.subr.mxu0 0.0
        %1299 = vmatpush1.msra.mxu0 0.0
        %1300 = vmatprep.subr.mxu0 0.0
        %1301 = vmatpush1.msra.mxu0 0.0
        %1302 = vmatprep.subr.mxu0 0.0
        %1303 = vmatpush1.msra.mxu0 0.0
        %1304 = vmatprep.subr.mxu0 0.0
        %1305 = vmatpush1.msra.mxu0 0.0
        %1306 = vmatprep.subr.mxu0 0.0
        %1307 = vmatpush1.msra.mxu0 0.0
        %1308 = vmatprep.subr.mxu0 0.0
        %1309 = vmatpush1.msra.mxu0 0.0
        %1310 = vmatprep.subr.mxu0 0.0
        %1311 = vmatpush1.msra.mxu0 0.0
        %1312 = vmatprep.subr.mxu0 0.0
        %1313 = vmatpush1.msra.mxu0 0.0
        %1314 = vmatprep.subr.mxu0 0.0
        %1315 = vmatpush1.msra.mxu0 0.0
        %1316 = vmatprep.subr.mxu0 0.0
        %1317 = vmatpush1.msra.mxu0 0.0
        %1318 = vmatprep.subr.mxu0 0.0
        %1319 = vmatpush1.msra.mxu0 0.0
        %1320 = vmatprep.subr.mxu0 0.0
        %1321 = vmatpush1.msra.mxu0 0.0
        %1322 = vmatprep.subr.mxu0 0.0
        %1323 = vmatpush1.msra.mxu0 0.0
        %1324 = vmatprep.subr.mxu0 0.0
        %1325 = vmatpush1.msra.mxu0 0.0
        %1326 = vmatprep.subr.mxu0 0.0
        %1327 = vmatpush1.msra.mxu0 0.0
        %1328 = vmatprep.subr.mxu0 0.0
        %1329 = vmatpush1.msra.mxu0 0.0
        %1330 = vmatprep.subr.mxu0 0.0
        %1331 = vmatpush1.msra.mxu0 0.0
        %1332 = vmatprep.subr.mxu0 0.0
        %1333 = vmatpush1.msra.mxu0 0.0
        %1334 = vmatprep.subr.mxu0 0.0
        %1335 = vmatpush1.msra.mxu0 0.0
        %1336 = vmatprep.subr.mxu0 0.0
        %1337 = vmatpush1.msra.mxu0 0.0
        %1338 = vmatprep.subr.mxu0 0.0
        %1339 = vmatpush1.msra.mxu0 0.0
        %1340 = vmatprep.subr.mxu0 0.0
        %1341 = vmatpush1.msra.mxu0 0.0
        %1342 = vmatprep.mubr.f32.mxu0 0.0
        %1343 = vmatmul.mubr.f32.gmra.mrb[0].mxu0 %v1273
        %v1344 = vpop.f32.mrb[0].mxu0
        %v1345 = vadd.f32 0.0, %v1344
        %v1346 = vpop.f32.mrb[0].mxu0
        %1347 = vmatprep.mubr.f32.mxu0 0.0
        %1348 = vmatmul.mubr.f32.gmra.mrb[0].mxu0 %v1276
        %v1349 = vpop.f32.mrb[0].mxu0
        %v1350 = vadd.f32 0.0, %v1349
        %v1351 = vpop.f32.mrb[0].mxu0
        %1352 = vdwg.mxu0
        %1353 = vst [vmem:[#allocation2] sm:$0xff] %v1266
        %1354 = vst [vmem:[#allocation2 + $0x8] sm:$0xff] %v1345
        %1355 = vst [vmem:[#allocation2 + $0x10] sm:$0xff] %v1350
        %v1356 = vld [vmem:[#allocation2] sm:$0xff]
        %v1357 = vld [vmem:[#allocation2 + $0x8] sm:$0xff]
        %v1358 = vld [vmem:[#allocation2 + $0x10] sm:$0xff]
        %v1359 = vld [vmem:[#allocation2 + $0x18] sm:$0xff]
        %1360 = vmatprep.subr.mxu0 0.0
        %1361 = vmatpush1.msra.mxu0 %v1356
        %1362 = vmatprep.subr.mxu0 0.0
        %1363 = vmatpush1.msra.mxu0 %v1357
        %1364 = vmatprep.subr.mxu0 0.0
        %1365 = vmatpush1.msra.mxu0 %v1358
        %1366 = vmatprep.subr.mxu0 0.0
        %1367 = vmatpush1.msra.mxu0 %v1359
        %1368 = vmatprep.subr.mxu0 0.0
        %1369 = vmatpush1.msra.mxu0 0.0
        %1370 = vmatprep.subr.mxu0 0.0
        %1371 = vmatpush1.msra.mxu0 0.0
        %1372 = vmatprep.subr.mxu0 0.0
        %1373 = vmatpush1.msra.mxu0 0.0
        %1374 = vmatprep.subr.mxu0 0.0
        %1375 = vmatpush1.msra.mxu0 0.0
        %1376 = vmatprep.subr.mxu0 0.0
        %1377 = vmatpush1.msra.mxu0 0.0
        %1378 = vmatprep.subr.mxu0 0.0
        %1379 = vmatpush1.msra.mxu0 0.0
        %1380 = vmatprep.subr.mxu0 0.0
        %1381 = vmatpush1.msra.mxu0 0.0
        %1382 = vmatprep.subr.mxu0 0.0
        %1383 = vmatpush1.msra.mxu0 0.0
        %1384 = vmatprep.subr.mxu0 0.0
        %1385 = vmatpush1.msra.mxu0 0.0
        %1386 = vmatprep.subr.mxu0 0.0
        %1387 = vmatpush1.msra.mxu0 0.0
        %1388 = vmatprep.subr.mxu0 0.0
        %1389 = vmatpush1.msra.mxu0 0.0
        %1390 = vmatprep.subr.mxu0 0.0
        %1391 = vmatpush1.msra.mxu0 0.0
        %1392 = vmatprep.subr.mxu0 0.0
        %1393 = vmatpush1.msra.mxu0 0.0
        %1394 = vmatprep.subr.mxu0 0.0
        %1395 = vmatpush1.msra.mxu0 0.0
        %1396 = vmatprep.subr.mxu0 0.0
        %1397 = vmatpush1.msra.mxu0 0.0
        %1398 = vmatprep.subr.mxu0 0.0
        %1399 = vmatpush1.msra.mxu0 0.0
        %1400 = vmatprep.subr.mxu0 0.0
        %1401 = vmatpush1.msra.mxu0 0.0
        %1402 = vmatprep.subr.mxu0 0.0
        %1403 = vmatpush1.msra.mxu0 0.0
        %1404 = vmatprep.subr.mxu0 0.0
        %1405 = vmatpush1.msra.mxu0 0.0
        %1406 = vmatprep.subr.mxu0 0.0
        %1407 = vmatpush1.msra.mxu0 0.0
        %1408 = vmatprep.subr.mxu0 0.0
        %1409 = vmatpush1.msra.mxu0 0.0
        %1410 = vmatprep.subr.mxu0 0.0
        %1411 = vmatpush1.msra.mxu0 0.0
        %1412 = vmatprep.subr.mxu0 0.0
        %1413 = vmatpush1.msra.mxu0 0.0
        %1414 = vmatprep.subr.mxu0 0.0
        %1415 = vmatpush1.msra.mxu0 0.0
        %1416 = vmatprep.subr.mxu0 0.0
        %1417 = vmatpush1.msra.mxu0 0.0
        %1418 = vmatprep.subr.mxu0 0.0
        %1419 = vmatpush1.msra.mxu0 0.0
        %1420 = vmatprep.subr.mxu0 0.0
        %1421 = vmatpush1.msra.mxu0 0.0
        %1422 = vmatprep.subr.mxu0 0.0
        %1423 = vmatpush1.msra.mxu0 0.0
        %1424 = vmatprep.mubr.f32.mxu0 0.0
        %1425 = vmatmul.mubr.f32.gmra.mrb[0].mxu0 %v357
        %v1426 = vpop.f32.mrb[0].mxu0
        %v1427 = vadd.f32 0.0, %v1426
        %v1428 = vpop.f32.mrb[0].mxu0
        %1429 = vdwg.mxu0
        %s1430 = scalar_lea.vmem %s216, 48 [#allocation3]
        %1431 = vst [vmem:[%s1430] sm:$0xff] %v1427
        %s1432 = scalar_lea.vmem %s225, 56
        %v1433 = vld [vmem:[%s1432] sm:$0xff]
        %s1434 = scalar_lea.vmem %s236, 112
        %v1435 = vld [vmem:[%s1434] sm:$0xff]
        %v1436 = vld [vmem:[%s1434 + $0x8] sm:$0xff]
        %v1437 = vld [vmem:[#allocation2] sm:$0xff]
        %v1438 = vld [vmem:[#allocation2 + $0x8] sm:$0xff]
        %v1440 = vsel %vm266, %v1437, 0
        %v1443 = vsel %vm266, %v1438, 0
        %1445 = vmatprep.subr.mxu0 0.0
        %1446 = vmatpush1.msra.mxu0 %v1435
        %1447 = vmatprep.subr.mxu0 0.0
        %1448 = vmatpush1.msra.mxu0 %v1436
        %1449 = vmatprep.subr.mxu0 0.0
        %1450 = vmatpush1.msra.mxu0 0.0
        %1451 = vmatprep.subr.mxu0 0.0
        %1452 = vmatpush1.msra.mxu0 0.0
        %1453 = vmatprep.subr.mxu0 0.0
        %1454 = vmatpush1.msra.mxu0 0.0
        %1455 = vmatprep.subr.mxu0 0.0
        %1456 = vmatpush1.msra.mxu0 0.0
        %1457 = vmatprep.subr.mxu0 0.0
        %1458 = vmatpush1.msra.mxu0 0.0
        %1459 = vmatprep.subr.mxu0 0.0
        %1460 = vmatpush1.msra.mxu0 0.0
        %1461 = vmatprep.subr.mxu0 0.0
        %1462 = vmatpush1.msra.mxu0 0.0
        %1463 = vmatprep.subr.mxu0 0.0
        %1464 = vmatpush1.msra.mxu0 0.0
        %1465 = vmatprep.subr.mxu0 0.0
        %1466 = vmatpush1.msra.mxu0 0.0
        %1467 = vmatprep.subr.mxu0 0.0
        %1468 = vmatpush1.msra.mxu0 0.0
        %1469 = vmatprep.subr.mxu0 0.0
        %1470 = vmatpush1.msra.mxu0 0.0
        %1471 = vmatprep.subr.mxu0 0.0
        %1472 = vmatpush1.msra.mxu0 0.0
        %1473 = vmatprep.subr.mxu0 0.0
        %1474 = vmatpush1.msra.mxu0 0.0
        %1475 = vmatprep.subr.mxu0 0.0
        %1476 = vmatpush1.msra.mxu0 0.0
        %1477 = vmatprep.subr.mxu0 0.0
        %1478 = vmatpush1.msra.mxu0 0.0
        %1479 = vmatprep.subr.mxu0 0.0
        %1480 = vmatpush1.msra.mxu0 0.0
        %1481 = vmatprep.subr.mxu0 0.0
        %1482 = vmatpush1.msra.mxu0 0.0
        %1483 = vmatprep.subr.mxu0 0.0
        %1484 = vmatpush1.msra.mxu0 0.0
        %1485 = vmatprep.subr.mxu0 0.0
        %1486 = vmatpush1.msra.mxu0 0.0
        %1487 = vmatprep.subr.mxu0 0.0
        %1488 = vmatpush1.msra.mxu0 0.0
        %1489 = vmatprep.subr.mxu0 0.0
        %1490 = vmatpush1.msra.mxu0 0.0
        %1491 = vmatprep.subr.mxu0 0.0
        %1492 = vmatpush1.msra.mxu0 0.0
        %1493 = vmatprep.subr.mxu0 0.0
        %1494 = vmatpush1.msra.mxu0 0.0
        %1495 = vmatprep.subr.mxu0 0.0
        %1496 = vmatpush1.msra.mxu0 0.0
        %1497 = vmatprep.subr.mxu0 0.0
        %1498 = vmatpush1.msra.mxu0 0.0
        %1499 = vmatprep.subr.mxu0 0.0
        %1500 = vmatpush1.msra.mxu0 0.0
        %1501 = vmatprep.subr.mxu0 0.0
        %1502 = vmatpush1.msra.mxu0 0.0
        %1503 = vmatprep.subr.mxu0 0.0
        %1504 = vmatpush1.msra.mxu0 0.0
        %1505 = vmatprep.subr.mxu0 0.0
        %1506 = vmatpush1.msra.mxu0 0.0
        %1507 = vmatprep.subr.mxu0 0.0
        %1508 = vmatpush1.msra.mxu0 0.0
        %1509 = vmatprep.mubr.f32.mxu0 0.0
        %1510 = vmatmul.mubr.f32.gmra.mrb[0].mxu0 %v1440
        %v1511 = vpop.f32.mrb[0].mxu0
        %v1512 = vadd.f32 0.0, %v1511
        %v1513 = vpop.f32.mrb[0].mxu0
        %1514 = vmatprep.mubr.f32.mxu0 0.0
        %1515 = vmatmul.mubr.f32.gmra.mrb[0].mxu0 %v1443
        %v1516 = vpop.f32.mrb[0].mxu0
        %v1517 = vadd.f32 0.0, %v1516
        %v1518 = vpop.f32.mrb[0].mxu0
        %1519 = vdwg.mxu0
        %1520 = vst [vmem:[#allocation2] sm:$0xff] %v1433
        %1521 = vst [vmem:[#allocation2 + $0x8] sm:$0xff] %v1512
        %1522 = vst [vmem:[#allocation2 + $0x10] sm:$0xff] %v1517
        %v1523 = vld [vmem:[#allocation2] sm:$0xff]
        %v1524 = vld [vmem:[#allocation2 + $0x8] sm:$0xff]
        %v1525 = vld [vmem:[#allocation2 + $0x10] sm:$0xff]
        %v1526 = vld [vmem:[#allocation2 + $0x18] sm:$0xff]
        %1527 = vmatprep.subr.mxu0 0.0
        %1528 = vmatpush1.msra.mxu0 %v1523
        %1529 = vmatprep.subr.mxu0 0.0
        %1530 = vmatpush1.msra.mxu0 %v1524
        %1531 = vmatprep.subr.mxu0 0.0
        %1532 = vmatpush1.msra.mxu0 %v1525
        %1533 = vmatprep.subr.mxu0 0.0
        %1534 = vmatpush1.msra.mxu0 %v1526
        %1535 = vmatprep.subr.mxu0 0.0
        %1536 = vmatpush1.msra.mxu0 0.0
        %1537 = vmatprep.subr.mxu0 0.0
        %1538 = vmatpush1.msra.mxu0 0.0
        %1539 = vmatprep.subr.mxu0 0.0
        %1540 = vmatpush1.msra.mxu0 0.0
        %1541 = vmatprep.subr.mxu0 0.0
        %1542 = vmatpush1.msra.mxu0 0.0
        %1543 = vmatprep.subr.mxu0 0.0
        %1544 = vmatpush1.msra.mxu0 0.0
        %1545 = vmatprep.subr.mxu0 0.0
        %1546 = vmatpush1.msra.mxu0 0.0
        %1547 = vmatprep.subr.mxu0 0.0
        %1548 = vmatpush1.msra.mxu0 0.0
        %1549 = vmatprep.subr.mxu0 0.0
        %1550 = vmatpush1.msra.mxu0 0.0
        %1551 = vmatprep.subr.mxu0 0.0
        %1552 = vmatpush1.msra.mxu0 0.0
        %1553 = vmatprep.subr.mxu0 0.0
        %1554 = vmatpush1.msra.mxu0 0.0
        %1555 = vmatprep.subr.mxu0 0.0
        %1556 = vmatpush1.msra.mxu0 0.0
        %1557 = vmatprep.subr.mxu0 0.0
        %1558 = vmatpush1.msra.mxu0 0.0
        %1559 = vmatprep.subr.mxu0 0.0
        %1560 = vmatpush1.msra.mxu0 0.0
        %1561 = vmatprep.subr.mxu0 0.0
        %1562 = vmatpush1.msra.mxu0 0.0
        %1563 = vmatprep.subr.mxu0 0.0
        %1564 = vmatpush1.msra.mxu0 0.0
        %1565 = vmatprep.subr.mxu0 0.0
        %1566 = vmatpush1.msra.mxu0 0.0
        %1567 = vmatprep.subr.mxu0 0.0
        %1568 = vmatpush1.msra.mxu0 0.0
        %1569 = vmatprep.subr.mxu0 0.0
        %1570 = vmatpush1.msra.mxu0 0.0
        %1571 = vmatprep.subr.mxu0 0.0
        %1572 = vmatpush1.msra.mxu0 0.0
        %1573 = vmatprep.subr.mxu0 0.0
        %1574 = vmatpush1.msra.mxu0 0.0
        %1575 = vmatprep.subr.mxu0 0.0
        %1576 = vmatpush1.msra.mxu0 0.0
        %1577 = vmatprep.subr.mxu0 0.0
        %1578 = vmatpush1.msra.mxu0 0.0
        %1579 = vmatprep.subr.mxu0 0.0
        %1580 = vmatpush1.msra.mxu0 0.0
        %1581 = vmatprep.subr.mxu0 0.0
        %1582 = vmatpush1.msra.mxu0 0.0
        %1583 = vmatprep.subr.mxu0 0.0
        %1584 = vmatpush1.msra.mxu0 0.0
        %1585 = vmatprep.subr.mxu0 0.0
        %1586 = vmatpush1.msra.mxu0 0.0
        %1587 = vmatprep.subr.mxu0 0.0
        %1588 = vmatpush1.msra.mxu0 0.0
        %1589 = vmatprep.subr.mxu0 0.0
        %1590 = vmatpush1.msra.mxu0 0.0
        %1591 = vmatprep.mubr.f32.mxu0 0.0
        %1592 = vmatmul.mubr.f32.gmra.mrb[0].mxu0 %v357
        %v1593 = vpop.f32.mrb[0].mxu0
        %v1594 = vadd.f32 0.0, %v1593
        %v1595 = vpop.f32.mrb[0].mxu0
        %1596 = vdwg.mxu0
        %s1597 = scalar_lea.vmem %s216, 56 [#allocation3]
        %1598 = vst [vmem:[%s1597] sm:$0xff] %v1594
        %s1599 = sand.u32 %s116, 1
        %s1600 = scalar_lea.sflag [#allocation4], %s1599
        %s1601 = sand.u32 %s116, 1
        %s1602 = smul.addr %s1601, 64
        %s1603 = scalar_lea.vmem [#allocation3], %s1602
        // Predicated region
        $region37: #{graph_filter_db.1} parent=31 // pred_check
          %p1604 = pneg %p126
        $region38: #{graph_filter_db.1} parent=31 // pred_check_branch
          %1606 = sbr.rel (%p1604) target = $region40
        $region39: #{graph_filter_db.1} parent=31 // pred_region
          %s1607 = smul.u32 8, %s22
          %s1609 = ssub.s32 1024, 1024
          %1610 = vsyncadd %s1600, %s1609
          %s1611 = smul.addr %s21, 8
          %s1612 = sadd.s32 %s1607, %s1611
          %s1613 = smul.addr %s1612, 128
          %s1614 = scalar_lea.hbm %s3, %s1613
          %s1615 = sshll.u32 %s1603, 4
          %s1616 = int_to_ptr.vmem [resolvable:$true] %s1615
          %1621 = dma.vmem_to_hbm [thread:$0]  %s1616, 1024, %s1614, %s1600, 128, 128, 8
        $region40: #{graph_filter_db.1} parent=31 // pred_fallthru
          _
      $region32: #{graph_filter_db.1} parent=5 // pred_fallthru
        _
      %p1622 = scmp.le.s32.totalorder 2, %s12
      // Predicated region
      $region41: #{graph_filter_db.1} parent=5 // pred_check
        %p1623 = pneg %p1622
      $region42: #{graph_filter_db.1} parent=5 // pred_check_branch
        %1625 = sbr.rel (%p1623) target = $region44
      $region43: #{graph_filter_db.1} parent=5 // pred_region
        %s1626 = ssub.s32 %s12, 2
        // Predicated region
        $region45: #{graph_filter_db.1} parent=43 // pred_check
          %p1627 = pneg %p132
        $region46: #{graph_filter_db.1} parent=43 // pred_check_branch
          %1629 = sbr.rel (%p1627) target = $region48
        $region47: #{graph_filter_db.1} parent=43 // pred_region
          %s1630 = sand.u32 %s117, 1
          %s1631 = scalar_lea.sflag [#allocation4], %s1630
          %s1632 = sand.u32 %s117, 1
          %s1633 = smul.addr %s1632, 64
          %s1634 = scalar_lea.vmem [#allocation3], %s1633
          %1635 = dma.done %s1631, 1024
        $region48: #{graph_filter_db.1} parent=43 // pred_fallthru
          _
      $region44: #{graph_filter_db.1} parent=5 // pred_fallthru
        _
    $region6: #{graph_filter_db.1} parent=1 // loop_footer
      %s16 = sadd.s32 1, %s12
    $region7: #{graph_filter_db.1} parent=1 // loop_footer_branch
      %11 = sbr.rel target = $region3
    $region8: #{graph_filter_db.1} parent=1 // loop_exit
      _
    %1636 = vsyncpa [#allocation4], 1
    %s1637 = scalar_lea.sflag [#allocation4], 1
    %1638 = vsyncpa %s1637, 1

</llo_original>
